<compile_context>
chip_gen: v7x
topology: tpu7x:2x2x1
jax: 0.10.0
libtpu: 0.0.40
codegen_flags: <defaults>
</compile_context>

<pallas_src>
import functools

import numpy as np
import jax
import jax.numpy as jnp
from jax.experimental import pallas as pl
from jax.experimental.pallas import tpu as pltpu

POOL_SCALES = (1, 2, 3, 6)


def _round_up(x, m):
    return ((x + m - 1) // m) * m


def _vmem_limit(block_bytes):
    # Explicit scoped-VMEM request derived from the actual block footprint plus
    # headroom for internal scratch; floored at 24 MB, capped below 128 MiB.
    return int(min(max(block_bytes * 5 // 4 + (4 << 20), 24 << 20), 100 << 20))


# ----------------------------------------------------------------------------
# Kernel 1: 3x3 "same" conv (bias-free) + folded BN + ReLU
#   grid = (N, Nc_tiles, row_bands); weight block index is constant across the
#   inner band axis -> fetched once per Nc tile; activations arrive as a
#   TH-row band + 2-row halo of one padded array; the 9 (kh,kw) shifts are
#   in-VMEM slices; each dot accumulates into an f32 scratch.
# ----------------------------------------------------------------------------
def _conv3x3_kernel(xa_ref, xh_ref, w_ref, scale_ref, shift_ref, o_ref, acc_ref,
                    *, th, w_out):
    # xa_ref: (th, Wp, C)  padded rows [b*th, b*th+th)
    # xh_ref: (2,  Wp, C)  halo rows   [b*th+th, b*th+th+2)
    # w_ref : (9, C, nc)   resident weight slab (k = kh*3+kw)
    band = jnp.concatenate([xa_ref[...], xh_ref[...]], axis=0)   # (th+2, Wp, C)
    c = band.shape[-1]
    for k in range(9):
        kh, kw = divmod(k, 3)
        win = band[kh:kh + th, kw:kw + w_out, :].reshape(th * w_out, c)
        contrib = jnp.dot(win, w_ref[k], preferred_element_type=jnp.float32)
        if k == 0:
            acc_ref[...] = contrib
        else:
            acc_ref[...] += contrib
    y = acc_ref[...] * scale_ref[...] + shift_ref[...]
    y = jnp.maximum(y, 0.0)
    o_ref[...] = y.reshape(o_ref.shape).astype(o_ref.dtype)


def conv3x3_bn_relu(x, w9, scale, shift, *, th=8, nc_tile=None):
    """x: (N, H, W, Ccat) bf16. w9: (9, Ccat, Nc) bf16 (k = kh*3+kw).
    scale/shift: (1, Nc) f32 folded BN.  Returns (N, H, W, Nc) bf16."""
    N, H, W, Ccat = x.shape
    Nc = w9.shape[-1]
    if nc_tile is None:
        nc_tile = Nc      # full weight resident (fits 128 MiB VMEM on v5e/v6e);
                          # pass a 128-multiple divisor of Nc on v7x (64 MiB VMEM).
    assert Nc % nc_tile == 0
    num_jn = Nc // nc_tile

    th = max(2, min(th, _round_up(H, 2)))
    th += th % 2                                    # even, for the 2-row halo stream
    num_bands = _round_up(H, th) // th
    hp = (num_bands + 1) * th                       # padded height (row 0 = top pad)
    w_work = _round_up(W, 8)
    wp = w_work + 2                                 # padded width (col 0 = left pad)

    xp = jnp.pad(x, ((0, 0), (1, hp - H - 1), (1, wp - W - 1), (0, 0)))

    in_specs = [
        pl.BlockSpec((None, th, wp, Ccat), lambda n, j, b: (n, b, 0, 0)),
        pl.BlockSpec((None, 2, wp, Ccat),
                     lambda n, j, b: (n, (b + 1) * (th // 2), 0, 0)),
        pl.BlockSpec((9, Ccat, nc_tile), lambda n, j, b: (0, 0, j)),
        pl.BlockSpec((1, nc_tile), lambda n, j, b: (0, j)),
        pl.BlockSpec((1, nc_tile), lambda n, j, b: (0, j)),
    ]
    out_spec = pl.BlockSpec((None, th, w_work, nc_tile),
                            lambda n, j, b: (n, b, 0, j))

    block_bytes = (
        2 * 9 * Ccat * nc_tile * 2          # resident weight (double-buffered) bf16
        + 2 * th * wp * Ccat * 2            # main activation band x2 buffers
        + 2 * 2 * wp * Ccat * 2             # halo rows x2 buffers
        + 2 * th * w_work * nc_tile * 2     # output x2 buffers
        + th * w_work * nc_tile * 4         # f32 accumulator scratch
        + 4 * 2 * nc_tile * 4               # scale / shift
    )

    kern = functools.partial(_conv3x3_kernel, th=th, w_out=w_work)
    out = pl.pallas_call(
        kern,
        out_shape=jax.ShapeDtypeStruct((N, num_bands * th, w_work, Nc), jnp.bfloat16),
        grid_spec=pltpu.PrefetchScalarGridSpec(
            num_scalar_prefetch=0,
            grid=(N, num_jn, num_bands),
            in_specs=in_specs,
            out_specs=out_spec,
            scratch_shapes=[pltpu.VMEM((th * w_work, nc_tile), jnp.float32)]),
        compiler_params=pltpu.CompilerParams(
            dimension_semantics=("parallel", "parallel", "parallel"),
            vmem_limit_bytes=_vmem_limit(block_bytes)),
    )(xp, xp, w9, scale, shift)
    return out[:, :H, :W, :]


# ----------------------------------------------------------------------------
# Kernel 2: fused final 1x1 conv (+bias) + log_softmax over padded classes
# ----------------------------------------------------------------------------
def _cls_logsoftmax_kernel(x_ref, w_ref, b_ref, o_ref):
    logits = jnp.dot(x_ref[...], w_ref[...],
                     preferred_element_type=jnp.float32) + b_ref[...]
    m = jnp.max(logits, axis=-1, keepdims=True)
    s = logits - m
    lse = jnp.log(jnp.sum(jnp.exp(s), axis=-1, keepdims=True))
    o_ref[...] = (s - lse).astype(o_ref.dtype)


def cls_log_softmax(x, w, b, *, tm=1024):
    """x: (M, K) bf16; w: (K, Cpad) bf16; b: (1, Cpad) f32 (-1e30 in padded slots).
    Returns (M, Cpad) f32 log-probs normalized over the Cpad axis."""
    M, K = x.shape
    Cp = w.shape[1]
    tm = min(tm, _round_up(M, 8))
    m_pad = _round_up(M, tm)
    if m_pad != M:
        x = jnp.pad(x, ((0, m_pad - M), (0, 0)))
    block_bytes = 2 * tm * K * 2 + 2 * K * Cp * 2 + 2 * tm * Cp * 4 + 2 * Cp * 4
    out = pl.pallas_call(
        _cls_logsoftmax_kernel,
        out_shape=jax.ShapeDtypeStruct((m_pad, Cp), jnp.float32),
        grid_spec=pltpu.PrefetchScalarGridSpec(
            num_scalar_prefetch=0,
            grid=(m_pad // tm,),
            in_specs=[pl.BlockSpec((tm, K), lambda i: (i, 0)),
                      pl.BlockSpec((K, Cp), lambda i: (0, 0)),
                      pl.BlockSpec((1, Cp), lambda i: (0, 0))],
            out_specs=pl.BlockSpec((tm, Cp), lambda i: (i, 0))),
        compiler_params=pltpu.CompilerParams(
            dimension_semantics=("parallel",),
            vmem_limit_bytes=_vmem_limit(block_bytes)),
    )(x, w, b)
    return out[:M]


# ----------------------------------------------------------------------------
# Glue: adaptive-avg-pool and bilinear-upsample as (small) linear operators
# ----------------------------------------------------------------------------
def adaptive_pool_matrix(in_size, out_size):
    P = np.zeros((out_size, in_size), np.float32)
    for i in range(out_size):
        start = (i * in_size) // out_size
        end = -(-((i + 1) * in_size) // out_size)  # ceil
        P[i, start:end] = 1.0 / float(end - start)
    return jnp.asarray(P)


def bilinear_upsample_matrix(in_size, out_size):
    """align_corners=False, matching F.upsample(mode='bilinear', align_corners=False)."""
    U = np.zeros((out_size, in_size), np.float32)
    if in_size == 1:
        U[:, 0] = 1.0
        return jnp.asarray(U)
    scale = in_size / out_size
    for o in range(out_size):
        src = max((o + 0.5) * scale - 0.5, 0.0)
        x0 = min(int(np.floor(src)), in_size - 1)
        lam = src - x0
        x1 = min(x0 + 1, in_size - 1)
        U[o, x0] += 1.0 - lam
        U[o, x1] += lam
    return jnp.asarray(U)


# ----------------------------------------------------------------------------
# PPMBilinear forward
# ----------------------------------------------------------------------------
def ppm_bilinear_forward(conv5_nchw, params):
    """conv5_nchw: (N, fc_dim, H, W) f32.  Returns (N, num_class, H, W) log-probs."""
    N, _, H, W = conv5_nchw.shape
    x = jnp.transpose(conv5_nchw, (0, 2, 3, 1)).astype(jnp.float32)  # NHWC

    # PPM branches: tiny (<= 6x6 spatial) 1x1 conv + BN + ReLU; kept in XLA
    # (Pallas launch/step overhead would dominate).  Outputs cast to bf16.
    feats = [x.astype(jnp.bfloat16)]
    for scale, (w, bn_s, bn_b) in zip(POOL_SCALES, params["ppm"]):
        Ph = adaptive_pool_matrix(H, scale)
        Pw = adaptive_pool_matrix(W, scale)
        pooled = jnp.einsum("sh,nhwc,tw->nstc", Ph, x, Pw)          # (N, s, s, C)
        y = jnp.maximum(jnp.einsum("nstc,cd->nstd", pooled, w) * bn_s + bn_b, 0.0)
        Uh = bilinear_upsample_matrix(scale, H)
        Uw = bilinear_upsample_matrix(scale, W)
        feats.append(jnp.einsum("hs,nstd,wt->nhwd", Uh, y, Uw).astype(jnp.bfloat16))

    cat = jnp.concatenate(feats, axis=-1)                           # (N, H, W, Ccat) bf16

    mid = conv3x3_bn_relu(cat, params["conv_last_w9"],
                          params["bn_last_scale"], params["bn_last_shift"])
    # Dropout2d(0.1): identity in inference mode.
    mid2 = mid.reshape(N * H * W, -1)                               # (M, mid_pad) bf16

    logp = cls_log_softmax(mid2, params["cls_w"], params["cls_b"])  # (M, cls_pad) f32
    num_class = params["num_class"]
    out = logp[:, :num_class].reshape(N, H, W, num_class).transpose(0, 3, 1, 2)
    return out


# ----------------------------------------------------------------------------
# Deterministic parameter init (lane-dense padded where the kernels need it)
# ----------------------------------------------------------------------------
def make_params(key, fc_dim, ppm_ch, mid_ch, num_class):
    # TODO(synk): SynchronizedBatchNorm2d is realized in inference mode (folded
    # scale/shift with running_mean=0, running_var=1); training-mode cross-batch
    # statistics are not implemented.
    eps = 1e-5
    ks = jax.random.split(key, 16)
    ki = iter(ks)

    def bn_fold(kk, ch):
        gamma = 1.0 + 0.1 * jax.random.normal(kk, (1, ch), jnp.float32)
        beta = 0.1 * jax.random.normal(jax.random.fold_in(kk, 1), (1, ch), jnp.float32)
        return gamma / jnp.sqrt(1.0 + eps), beta   # running_var=1, running_mean=0

    ppm = []
    for _ in POOL_SCALES:
        w = 0.05 * jax.random.normal(next(ki), (fc_dim, ppm_ch), jnp.float32)
        s, b = bn_fold(next(ki), ppm_ch)
        ppm.append((w, s, b))

    cat_ch = fc_dim + len(POOL_SCALES) * ppm_ch
    mid_pad = _round_up(mid_ch, 128)      # lane-dense conv output / cls input
    cls_pad = _round_up(num_class, 128)   # lane-dense logits / log_softmax width

    w9 = 0.02 * jax.random.normal(next(ki), (9, cat_ch, mid_ch), jnp.float32)
    w9 = jnp.pad(w9, ((0, 0), (0, 0), (0, mid_pad - mid_ch)))
    bn_s, bn_b = bn_fold(next(ki), mid_ch)
    bn_s = jnp.pad(bn_s, ((0, 0), (0, mid_pad - mid_ch)))
    bn_b = jnp.pad(bn_b, ((0, 0), (0, mid_pad - mid_ch)))   # padded mid channels -> exactly 0

    cls_w = 0.05 * jax.random.normal(next(ki), (mid_ch, num_class), jnp.float32)
    cls_w = jnp.pad(cls_w, ((0, mid_pad - mid_ch), (0, cls_pad - num_class)))
    cls_b = 0.05 * jax.random.normal(next(ki), (1, num_class), jnp.float32)
    # Padded class slots get a huge negative bias so they contribute 0 to the
    # softmax normalization (logit math stays f32); sliced away after the kernel.
    cls_b = jnp.pad(cls_b, ((0, 0), (0, cls_pad - num_class)), constant_values=-1e30)

    return dict(ppm=ppm,
                conv_last_w9=w9.astype(jnp.bfloat16),
                bn_last_scale=bn_s, bn_last_shift=bn_b,
                cls_w=cls_w.astype(jnp.bfloat16), cls_b=cls_b,
                num_class=num_class)


if __name__ == "__main__":
    # Small shapes consistent with the module (scaled-down channel counts).
    N, fc_dim, H, W = 2, 32, 16, 16
    ppm_ch, mid_ch, num_class = 16, 16, 8     # module uses 512 / 512 / 150

    key = jax.random.PRNGKey(0)
    k_in, k_par = jax.random.split(key)
    conv5 = jax.random.normal(k_in, (N, fc_dim, H, W), jnp.float32)
    params = make_params(k_par, fc_dim, ppm_ch, mid_ch, num_class)

    out = ppm_bilinear_forward(conv5, params)
    out = jax.block_until_ready(out)

    assert out.shape == (N, num_class, H, W), out.shape
    # log_softmax sanity: exp(out) sums to 1 over the class dim.
    sums = np.asarray(jnp.sum(jnp.exp(out), axis=1))
    assert np.allclose(sums, 1.0, atol=1e-3), sums
    print("KERNEL_OK")
</pallas_src>

<mosaic_0001>
module attributes {stable_mosaic.version = 11 : i64} {
  func.func @_conv3x3_kernel(%arg0: i32, %arg1: i32, %arg2: i32, %arg3: memref<1x8x18x96xbf16, #tpu.memory_space<vmem>>, %arg4: memref<1x2x18x96xbf16, #tpu.memory_space<vmem>>, %arg5: memref<9x96x128xbf16, #tpu.memory_space<vmem>>, %arg6: memref<1x128xf32, #tpu.memory_space<vmem>>, %arg7: memref<1x128xf32, #tpu.memory_space<vmem>>, %arg8: memref<1x8x16x128xbf16, #tpu.memory_space<vmem>>, %arg9: memref<128x128xf32, #tpu.memory_space<vmem>>) attributes {dimension_semantics = [#tpu.dimension_semantics<parallel>, #tpu.dimension_semantics<parallel>, #tpu.dimension_semantics<parallel>], iteration_bounds = array<i64: 2, 1, 2>, scalar_prefetch = 0 : i64, scratch_operands = 1 : i64, tpu.core_type = #tpu.core_type<tc>, window_params = [{transform_indices = @transform_0, window_bounds = array<i64: 1, 8, 18, 96>}, {transform_indices = @transform_1, window_bounds = array<i64: 1, 2, 18, 96>}, {transform_indices = @transform_2, window_bounds = array<i64: 9, 96, 128>}, {transform_indices = @transform_3, window_bounds = array<i64: 1, 128>}, {transform_indices = @transform_4, window_bounds = array<i64: 1, 128>}, {transform_indices = @transform_5, window_bounds = array<i64: 1, 8, 16, 128>}]} {
    %c0 = arith.constant 0 : index
    %c0_0 = arith.constant 0 : index
    %c0_1 = arith.constant 0 : index
    %c0_2 = arith.constant 0 : index
    %0 = vector.load %arg3[%c0, %c0_0, %c0_1, %c0_2] : memref<1x8x18x96xbf16, #tpu.memory_space<vmem>>, vector<1x8x18x96xbf16>
    %1 = vector.shape_cast %0 : vector<1x8x18x96xbf16> to vector<8x18x96xbf16>
    %c0_3 = arith.constant 0 : index
    %c0_4 = arith.constant 0 : index
    %c0_5 = arith.constant 0 : index
    %c0_6 = arith.constant 0 : index
    %2 = vector.load %arg4[%c0_3, %c0_4, %c0_5, %c0_6] : memref<1x2x18x96xbf16, #tpu.memory_space<vmem>>, vector<1x2x18x96xbf16>
    %3 = vector.shape_cast %2 : vector<1x2x18x96xbf16> to vector<2x18x96xbf16>
    %4 = tpu.concatenate %1, %3 in 0 : vector<8x18x96xbf16>, vector<2x18x96xbf16> -> vector<10x18x96xbf16>
    %5 = vector.extract_strided_slice %4 {offsets = [0, 0, 0], sizes = [8, 16, 96], strides = [1, 1, 1]} : vector<10x18x96xbf16> to vector<8x16x96xbf16>
    %6 = vector.shape_cast %5 : vector<8x16x96xbf16> to vector<128x96xbf16>
    %c0_7 = arith.constant 0 : index
    %c0_8 = arith.constant 0 : index
    %c0_9 = arith.constant 0 : index
    %7 = vector.load %arg5[%c0_7, %c0_8, %c0_9] : memref<9x96x128xbf16, #tpu.memory_space<vmem>>, vector<1x96x128xbf16>
    %8 = vector.shape_cast %7 : vector<1x96x128xbf16> to vector<96x128xbf16>
    %cst = arith.constant dense<0.000000e+00> : vector<128x128xf32>
    %9 = tpu.matmul %6, %8, %cst {dimension_numbers = #tpu.dot_dimension_numbers<[1], [0], [0], [1], [0, 0, 1, 1], [], []>} : vector<128x96xbf16>, vector<96x128xbf16>, vector<128x128xf32> -> vector<128x128xf32>
    %c0_10 = arith.constant 0 : index
    %c0_11 = arith.constant 0 : index
    %10 = vector.load %arg9[%c0_10, %c0_11] : memref<128x128xf32, #tpu.memory_space<vmem>>, vector<128x128xf32>
    tpu.vector_store %arg9[%c0_10, %c0_11], %9 {strides = array<i32>} : memref<128x128xf32, #tpu.memory_space<vmem>>, vector<128x128xf32>,
    %11 = vector.extract_strided_slice %4 {offsets = [0, 1, 0], sizes = [8, 16, 96], strides = [1, 1, 1]} : vector<10x18x96xbf16> to vector<8x16x96xbf16>
    %12 = vector.shape_cast %11 : vector<8x16x96xbf16> to vector<128x96xbf16>
    %c1 = arith.constant 1 : index
    %c0_12 = arith.constant 0 : index
    %c0_13 = arith.constant 0 : index
    %13 = vector.load %arg5[%c1, %c0_12, %c0_13] : memref<9x96x128xbf16, #tpu.memory_space<vmem>>, vector<1x96x128xbf16>
    %14 = vector.shape_cast %13 : vector<1x96x128xbf16> to vector<96x128xbf16>
    %cst_14 = arith.constant dense<0.000000e+00> : vector<128x128xf32>
    %15 = tpu.matmul %12, %14, %cst_14 {dimension_numbers = #tpu.dot_dimension_numbers<[1], [0], [0], [1], [0, 0, 1, 1], [], []>} : vector<128x96xbf16>, vector<96x128xbf16>, vector<128x128xf32> -> vector<128x128xf32>
    %c0_15 = arith.constant 0 : index
    %c0_16 = arith.constant 0 : index
    %16 = vector.load %arg9[%c0_15, %c0_16] : memref<128x128xf32, #tpu.memory_space<vmem>>, vector<128x128xf32>
    %17 = arith.addf %16, %15 : vector<128x128xf32>
    %c0_17 = arith.constant 0 : index
    %c0_18 = arith.constant 0 : index
    %18 = vector.load %arg9[%c0_17, %c0_18] : memref<128x128xf32, #tpu.memory_space<vmem>>, vector<128x128xf32>
    tpu.vector_store %arg9[%c0_17, %c0_18], %17 {strides = array<i32>} : memref<128x128xf32, #tpu.memory_space<vmem>>, vector<128x128xf32>,
    %19 = vector.extract_strided_slice %4 {offsets = [0, 2, 0], sizes = [8, 16, 96], strides = [1, 1, 1]} : vector<10x18x96xbf16> to vector<8x16x96xbf16>
    %20 = vector.shape_cast %19 : vector<8x16x96xbf16> to vector<128x96xbf16>
    %c2 = arith.constant 2 : index
    %c0_19 = arith.constant 0 : index
    %c0_20 = arith.constant 0 : index
    %21 = vector.load %arg5[%c2, %c0_19, %c0_20] : memref<9x96x128xbf16, #tpu.memory_space<vmem>>, vector<1x96x128xbf16>
    %22 = vector.shape_cast %21 : vector<1x96x128xbf16> to vector<96x128xbf16>
    %cst_21 = arith.constant dense<0.000000e+00> : vector<128x128xf32>
    %23 = tpu.matmul %20, %22, %cst_21 {dimension_numbers = #tpu.dot_dimension_numbers<[1], [0], [0], [1], [0, 0, 1, 1], [], []>} : vector<128x96xbf16>, vector<96x128xbf16>, vector<128x128xf32> -> vector<128x128xf32>
    %c0_22 = arith.constant 0 : index
    %c0_23 = arith.constant 0 : index
    %24 = vector.load %arg9[%c0_22, %c0_23] : memref<128x128xf32, #tpu.memory_space<vmem>>, vector<128x128xf32>
    %25 = arith.addf %24, %23 : vector<128x128xf32>
    %c0_24 = arith.constant 0 : index
    %c0_25 = arith.constant 0 : index
    %26 = vector.load %arg9[%c0_24, %c0_25] : memref<128x128xf32, #tpu.memory_space<vmem>>, vector<128x128xf32>
    tpu.vector_store %arg9[%c0_24, %c0_25], %25 {strides = array<i32>} : memref<128x128xf32, #tpu.memory_space<vmem>>, vector<128x128xf32>,
    %27 = vector.extract_strided_slice %4 {offsets = [1, 0, 0], sizes = [8, 16, 96], strides = [1, 1, 1]} : vector<10x18x96xbf16> to vector<8x16x96xbf16>
    %28 = vector.shape_cast %27 : vector<8x16x96xbf16> to vector<128x96xbf16>
    %c3 = arith.constant 3 : index
    %c0_26 = arith.constant 0 : index
    %c0_27 = arith.constant 0 : index
    %29 = vector.load %arg5[%c3, %c0_26, %c0_27] : memref<9x96x128xbf16, #tpu.memory_space<vmem>>, vector<1x96x128xbf16>
    %30 = vector.shape_cast %29 : vector<1x96x128xbf16> to vector<96x128xbf16>
    %cst_28 = arith.constant dense<0.000000e+00> : vector<128x128xf32>
    %31 = tpu.matmul %28, %30, %cst_28 {dimension_numbers = #tpu.dot_dimension_numbers<[1], [0], [0], [1], [0, 0, 1, 1], [], []>} : vector<128x96xbf16>, vector<96x128xbf16>, vector<128x128xf32> -> vector<128x128xf32>
    %c0_29 = arith.constant 0 : index
    %c0_30 = arith.constant 0 : index
    %32 = vector.load %arg9[%c0_29, %c0_30] : memref<128x128xf32, #tpu.memory_space<vmem>>, vector<128x128xf32>
    %33 = arith.addf %32, %31 : vector<128x128xf32>
    %c0_31 = arith.constant 0 : index
    %c0_32 = arith.constant 0 : index
    %34 = vector.load %arg9[%c0_31, %c0_32] : memref<128x128xf32, #tpu.memory_space<vmem>>, vector<128x128xf32>
    tpu.vector_store %arg9[%c0_31, %c0_32], %33 {strides = array<i32>} : memref<128x128xf32, #tpu.memory_space<vmem>>, vector<128x128xf32>,
    %35 = vector.extract_strided_slice %4 {offsets = [1, 1, 0], sizes = [8, 16, 96], strides = [1, 1, 1]} : vector<10x18x96xbf16> to vector<8x16x96xbf16>
    %36 = vector.shape_cast %35 : vector<8x16x96xbf16> to vector<128x96xbf16>
    %c4 = arith.constant 4 : index
    %c0_33 = arith.constant 0 : index
    %c0_34 = arith.constant 0 : index
    %37 = vector.load %arg5[%c4, %c0_33, %c0_34] : memref<9x96x128xbf16, #tpu.memory_space<vmem>>, vector<1x96x128xbf16>
    %38 = vector.shape_cast %37 : vector<1x96x128xbf16> to vector<96x128xbf16>
    %cst_35 = arith.constant dense<0.000000e+00> : vector<128x128xf32>
    %39 = tpu.matmul %36, %38, %cst_35 {dimension_numbers = #tpu.dot_dimension_numbers<[1], [0], [0], [1], [0, 0, 1, 1], [], []>} : vector<128x96xbf16>, vector<96x128xbf16>, vector<128x128xf32> -> vector<128x128xf32>
    %c0_36 = arith.constant 0 : index
    %c0_37 = arith.constant 0 : index
    %40 = vector.load %arg9[%c0_36, %c0_37] : memref<128x128xf32, #tpu.memory_space<vmem>>, vector<128x128xf32>
    %41 = arith.addf %40, %39 : vector<128x128xf32>
    %c0_38 = arith.constant 0 : index
    %c0_39 = arith.constant 0 : index
    %42 = vector.load %arg9[%c0_38, %c0_39] : memref<128x128xf32, #tpu.memory_space<vmem>>, vector<128x128xf32>
    tpu.vector_store %arg9[%c0_38, %c0_39], %41 {strides = array<i32>} : memref<128x128xf32, #tpu.memory_space<vmem>>, vector<128x128xf32>,
    %43 = vector.extract_strided_slice %4 {offsets = [1, 2, 0], sizes = [8, 16, 96], strides = [1, 1, 1]} : vector<10x18x96xbf16> to vector<8x16x96xbf16>
    %44 = vector.shape_cast %43 : vector<8x16x96xbf16> to vector<128x96xbf16>
    %c5 = arith.constant 5 : index
    %c0_40 = arith.constant 0 : index
    %c0_41 = arith.constant 0 : index
    %45 = vector.load %arg5[%c5, %c0_40, %c0_41] : memref<9x96x128xbf16, #tpu.memory_space<vmem>>, vector<1x96x128xbf16>
    %46 = vector.shape_cast %45 : vector<1x96x128xbf16> to vector<96x128xbf16>
    %cst_42 = arith.constant dense<0.000000e+00> : vector<128x128xf32>
    %47 = tpu.matmul %44, %46, %cst_42 {dimension_numbers = #tpu.dot_dimension_numbers<[1], [0], [0], [1], [0, 0, 1, 1], [], []>} : vector<128x96xbf16>, vector<96x128xbf16>, vector<128x128xf32> -> vector<128x128xf32>
    %c0_43 = arith.constant 0 : index
    %c0_44 = arith.constant 0 : index
    %48 = vector.load %arg9[%c0_43, %c0_44] : memref<128x128xf32, #tpu.memory_space<vmem>>, vector<128x128xf32>
    %49 = arith.addf %48, %47 : vector<128x128xf32>
    %c0_45 = arith.constant 0 : index
    %c0_46 = arith.constant 0 : index
    %50 = vector.load %arg9[%c0_45, %c0_46] : memref<128x128xf32, #tpu.memory_space<vmem>>, vector<128x128xf32>
    tpu.vector_store %arg9[%c0_45, %c0_46], %49 {strides = array<i32>} : memref<128x128xf32, #tpu.memory_space<vmem>>, vector<128x128xf32>,
    %51 = vector.extract_strided_slice %4 {offsets = [2, 0, 0], sizes = [8, 16, 96], strides = [1, 1, 1]} : vector<10x18x96xbf16> to vector<8x16x96xbf16>
    %52 = vector.shape_cast %51 : vector<8x16x96xbf16> to vector<128x96xbf16>
    %c6 = arith.constant 6 : index
    %c0_47 = arith.constant 0 : index
    %c0_48 = arith.constant 0 : index
    %53 = vector.load %arg5[%c6, %c0_47, %c0_48] : memref<9x96x128xbf16, #tpu.memory_space<vmem>>, vector<1x96x128xbf16>
    %54 = vector.shape_cast %53 : vector<1x96x128xbf16> to vector<96x128xbf16>
    %cst_49 = arith.constant dense<0.000000e+00> : vector<128x128xf32>
    %55 = tpu.matmul %52, %54, %cst_49 {dimension_numbers = #tpu.dot_dimension_numbers<[1], [0], [0], [1], [0, 0, 1, 1], [], []>} : vector<128x96xbf16>, vector<96x128xbf16>, vector<128x128xf32> -> vector<128x128xf32>
    %c0_50 = arith.constant 0 : index
    %c0_51 = arith.constant 0 : index
    %56 = vector.load %arg9[%c0_50, %c0_51] : memref<128x128xf32, #tpu.memory_space<vmem>>, vector<128x128xf32>
    %57 = arith.addf %56, %55 : vector<128x128xf32>
    %c0_52 = arith.constant 0 : index
    %c0_53 = arith.constant 0 : index
    %58 = vector.load %arg9[%c0_52, %c0_53] : memref<128x128xf32, #tpu.memory_space<vmem>>, vector<128x128xf32>
    tpu.vector_store %arg9[%c0_52, %c0_53], %57 {strides = array<i32>} : memref<128x128xf32, #tpu.memory_space<vmem>>, vector<128x128xf32>,
    %59 = vector.extract_strided_slice %4 {offsets = [2, 1, 0], sizes = [8, 16, 96], strides = [1, 1, 1]} : vector<10x18x96xbf16> to vector<8x16x96xbf16>
    %60 = vector.shape_cast %59 : vector<8x16x96xbf16> to vector<128x96xbf16>
    %c7 = arith.constant 7 : index
    %c0_54 = arith.constant 0 : index
    %c0_55 = arith.constant 0 : index
    %61 = vector.load %arg5[%c7, %c0_54, %c0_55] : memref<9x96x128xbf16, #tpu.memory_space<vmem>>, vector<1x96x128xbf16>
    %62 = vector.shape_cast %61 : vector<1x96x128xbf16> to vector<96x128xbf16>
    %cst_56 = arith.constant dense<0.000000e+00> : vector<128x128xf32>
    %63 = tpu.matmul %60, %62, %cst_56 {dimension_numbers = #tpu.dot_dimension_numbers<[1], [0], [0], [1], [0, 0, 1, 1], [], []>} : vector<128x96xbf16>, vector<96x128xbf16>, vector<128x128xf32> -> vector<128x128xf32>
    %c0_57 = arith.constant 0 : index
    %c0_58 = arith.constant 0 : index
    %64 = vector.load %arg9[%c0_57, %c0_58] : memref<128x128xf32, #tpu.memory_space<vmem>>, vector<128x128xf32>
    %65 = arith.addf %64, %63 : vector<128x128xf32>
    %c0_59 = arith.constant 0 : index
    %c0_60 = arith.constant 0 : index
    %66 = vector.load %arg9[%c0_59, %c0_60] : memref<128x128xf32, #tpu.memory_space<vmem>>, vector<128x128xf32>
    tpu.vector_store %arg9[%c0_59, %c0_60], %65 {strides = array<i32>} : memref<128x128xf32, #tpu.memory_space<vmem>>, vector<128x128xf32>,
    %67 = vector.extract_strided_slice %4 {offsets = [2, 2, 0], sizes = [8, 16, 96], strides = [1, 1, 1]} : vector<10x18x96xbf16> to vector<8x16x96xbf16>
    %68 = vector.shape_cast %67 : vector<8x16x96xbf16> to vector<128x96xbf16>
    %c8 = arith.constant 8 : index
    %c0_61 = arith.constant 0 : index
    %c0_62 = arith.constant 0 : index
    %69 = vector.load %arg5[%c8, %c0_61, %c0_62] : memref<9x96x128xbf16, #tpu.memory_space<vmem>>, vector<1x96x128xbf16>
    %70 = vector.shape_cast %69 : vector<1x96x128xbf16> to vector<96x128xbf16>
    %cst_63 = arith.constant dense<0.000000e+00> : vector<128x128xf32>
    %71 = tpu.matmul %68, %70, %cst_63 {dimension_numbers = #tpu.dot_dimension_numbers<[1], [0], [0], [1], [0, 0, 1, 1], [], []>} : vector<128x96xbf16>, vector<96x128xbf16>, vector<128x128xf32> -> vector<128x128xf32>
    %c0_64 = arith.constant 0 : index
    %c0_65 = arith.constant 0 : index
    %72 = vector.load %arg9[%c0_64, %c0_65] : memref<128x128xf32, #tpu.memory_space<vmem>>, vector<128x128xf32>
    %73 = arith.addf %72, %71 : vector<128x128xf32>
    %c0_66 = arith.constant 0 : index
    %c0_67 = arith.constant 0 : index
    %74 = vector.load %arg9[%c0_66, %c0_67] : memref<128x128xf32, #tpu.memory_space<vmem>>, vector<128x128xf32>
    tpu.vector_store %arg9[%c0_66, %c0_67], %73 {strides = array<i32>} : memref<128x128xf32, #tpu.memory_space<vmem>>, vector<128x128xf32>,
    %c0_68 = arith.constant 0 : index
    %c0_69 = arith.constant 0 : index
    %75 = vector.load %arg9[%c0_68, %c0_69] : memref<128x128xf32, #tpu.memory_space<vmem>>, vector<128x128xf32>
    %c0_70 = arith.constant 0 : index
    %c0_71 = arith.constant 0 : index
    %76 = vector.load %arg6[%c0_70, %c0_71] : memref<1x128xf32, #tpu.memory_space<vmem>>, vector<1x128xf32>
    %77 = vector.broadcast %76 : vector<1x128xf32> to vector<128x128xf32>
    %78 = arith.mulf %75, %77 : vector<128x128xf32>
    %c0_72 = arith.constant 0 : index
    %c0_73 = arith.constant 0 : index
    %79 = vector.load %arg7[%c0_72, %c0_73] : memref<1x128xf32, #tpu.memory_space<vmem>>, vector<1x128xf32>
    %80 = vector.broadcast %79 : vector<1x128xf32> to vector<128x128xf32>
    %81 = arith.addf %78, %80 : vector<128x128xf32>
    %cst_74 = arith.constant 0.000000e+00 : f32
    %82 = vector.broadcast %cst_74 : f32 to vector<128x128xf32>
    %83 = arith.maximumf %81, %82 : vector<128x128xf32>
    %84 = vector.shape_cast %83 : vector<128x128xf32> to vector<8x16x128xf32>
    %85 = arith.truncf %84 : vector<8x16x128xf32> to vector<8x16x128xbf16>
    %c0_75 = arith.constant 0 : index
    %c0_76 = arith.constant 0 : index
    %c0_77 = arith.constant 0 : index
    %c0_78 = arith.constant 0 : index
    %86 = vector.load %arg8[%c0_75, %c0_76, %c0_77, %c0_78] : memref<1x8x16x128xbf16, #tpu.memory_space<vmem>>, vector<1x8x16x128xbf16>
    %87 = vector.shape_cast %86 : vector<1x8x16x128xbf16> to vector<8x16x128xbf16>
    %88 = vector.shape_cast %85 : vector<8x16x128xbf16> to vector<1x8x16x128xbf16>
    tpu.vector_store %arg8[%c0_75, %c0_76, %c0_77, %c0_78], %88 {strides = array<i32>} : memref<1x8x16x128xbf16, #tpu.memory_space<vmem>>, vector<1x8x16x128xbf16>,
    return
  }
  func.func @transform_0(%arg0: i32, %arg1: i32, %arg2: i32) -> (i32, i32, i32, i32) {
    %c0_i32 = arith.constant 0 : i32
    %c0_i32_0 = arith.constant 0 : i32
    %c0_i32_1 = arith.constant 0 : i32
    return %arg0, %arg2, %c0_i32, %c0_i32_0 : i32, i32, i32, i32
  }
  func.func @transform_1(%arg0: i32, %arg1: i32, %arg2: i32) -> (i32, i32, i32, i32) {
    %c1_i32 = arith.constant 1 : i32
    %0 = arith.addi %arg2, %c1_i32 : i32
    %c4_i32 = arith.constant 4 : i32
    %1 = arith.muli %0, %c4_i32 : i32
    %c0_i32 = arith.constant 0 : i32
    %c0_i32_0 = arith.constant 0 : i32
    %c0_i32_1 = arith.constant 0 : i32
    return %arg0, %1, %c0_i32, %c0_i32_0 : i32, i32, i32, i32
  }
  func.func @transform_2(%arg0: i32, %arg1: i32, %arg2: i32) -> (i32, i32, i32) {
    %c0_i32 = arith.constant 0 : i32
    %c0_i32_0 = arith.constant 0 : i32
    %c0_i32_1 = arith.constant 0 : i32
    return %c0_i32, %c0_i32_0, %arg1 : i32, i32, i32
  }
  func.func @transform_3(%arg0: i32, %arg1: i32, %arg2: i32) -> (i32, i32) {
    %c0_i32 = arith.constant 0 : i32
    %c0_i32_0 = arith.constant 0 : i32
    return %c0_i32, %arg1 : i32, i32
  }
  func.func @transform_4(%arg0: i32, %arg1: i32, %arg2: i32) -> (i32, i32) {
    %c0_i32 = arith.constant 0 : i32
    %c0_i32_0 = arith.constant 0 : i32
    return %c0_i32, %arg1 : i32, i32
  }
  func.func @transform_5(%arg0: i32, %arg1: i32, %arg2: i32) -> (i32, i32, i32, i32) {
    %c0_i32 = arith.constant 0 : i32
    %c0_i32_0 = arith.constant 0 : i32
    return %arg0, %arg2, %c0_i32, %arg1 : i32, i32, i32, i32
  }
}

</mosaic_0001>

<llo_original>
// kernel: tpu_custom_call.1
$region0: #{tpu_custom_call.1}
  #allocation0 [shape = 'u32[]', space=smem, size = 0x4, offset = 0x4, fixed_abs, tag = 'smem constant byte address 0x4 - core index']
  #allocation1 [shape = 'u32[144,128]{1,0:T(1,128)}', space=vmem, size = 0x12000, scoped, tag = 'internal scratch']
  #allocation2 [shape = 'f32[128,128]{1,0:T(8,128)}', space=vmem, size = 0x10000, scoped, tag = 'scratch operand']
  %s0 = inlined_call_operand.vmem [shape: bf16[2,24,18,96], index: 0, kind: input, shape index: {}]
  %s1 = inlined_call_operand.vmem [shape: bf16[2,24,18,96], index: 1, kind: input, shape index: {}]
  %s2 = inlined_call_operand.vmem [shape: bf16[9,96,128], index: 2, kind: input, shape index: {}]
  %s3 = inlined_call_operand.vmem [shape: f32[1,128], index: 3, kind: input, shape index: {}]
  %s4 = inlined_call_operand.vmem [shape: f32[1,128], index: 4, kind: input, shape index: {}]
  %s5 = inlined_call_operand.hbm [shape: bf16[2,16,16,128], index: 5, kind: output, shape index: {}]
  %s6 = sld [smem:[#allocation0]]
  $region53: #{tpu_custom_call.1} parent=0
    _
  %s8 = ssub.s32 1, %s6
  %s9 = scalar_select 0, %s8, %s6
  $region1: #{tpu_custom_call.1} parent=0
    #allocation3 [shape = 'u8[65536]{0}', space=vmem, size = 0x10000, scoped, tag = 'output window, operand 0']
    #allocation4 [shape = 's32[2]{0}', space=sflag, size = 0x8, scoped, tag = 'scoped memory for tpu_custom_call.1']
    %10 = vsyncpa [#allocation4], 0
    %s11 = scalar_lea.sflag [#allocation4], 1
    %12 = vsyncpa %s11, 0
    loop: start=0, step=1, limit=6
    $region2: #{tpu_custom_call.1} parent=1 // loop_pre_header
      _
    $region3: #{tpu_custom_call.1} parent=1 // loop_header
      %s14 = sphi 0, %s18
      %p15 = scmp.ge.s32.totalorder %s14, 6
      %s21 = sphi 0, %s40
      %s22 = sphi 0, %s36
      %s23 = sphi 0, %s32
      %s24 = sphi 0, %s21
      %s25 = sphi 0, %s22
      %s26 = sphi 0, %s23
      %s27 = sphi 0, %s24
      %s28 = sphi 0, %s25
      %s29 = sphi 0, %s26
      %s45 = sphi 0, %s47
      %s48 = sphi 0, %s45
      %s49 = sphi 0, %s48
      %s65 = sphi 0, %s49
      %s77 = sphi 0, %s79
      %s80 = sphi 0, %s77
      %s81 = sphi 0, %s80
      %s97 = sphi 0, %s81
      %s103 = sphi 0, %s105
      %s106 = sphi 0, %s103
      %s107 = sphi 0, %s106
      %s123 = sphi 0, %s107
      %s129 = sphi 0, %s131
      %s132 = sphi 0, %s129
      %s133 = sphi 0, %s132
      %s149 = sphi 0, %s133
      %s155 = sphi 0, %s157
      %s158 = sphi 0, %s155
      %s159 = sphi 0, %s158
      %s175 = sphi 0, %s159
      %s185 = sphi 0, %s187
      %s188 = sphi 0, %s185
      %s189 = sphi 0, %s188
      %s205 = sphi 0, %s189
    $region4: #{tpu_custom_call.1} parent=1 // loop_header_branch
      %17 = sbr.rel (%p15) target = $region8
    $region5: #{tpu_custom_call.1} parent=1 // loop_body
      %s19 = ssub.s32 %s14, 1
      %s20 = ssub.s32 %s14, 2
      %s30 = sadd.s32 1, %s23
      %p31 = scmp.ge.s32.totalorder %s30, 2
      %s32 = scalar_select %p31, 0, %s30
      %s33 = sadd.s32 1, %s22
      %s34 = scalar_select %p31, %s33, %s22
      %p35 = scmp.ge.s32.totalorder %s34, 1
      %s36 = scalar_select %p35, 0, %s34
      %s37 = sadd.s32 1, %s21
      %s38 = scalar_select %p35, %s37, %s21
      %p39 = scmp.ge.s32.totalorder %s38, 2
      %s40 = scalar_select %p39, 0, %s38
      %s41 = ssub.s32 %s21, %s40
      %s42 = ssub.s32 %s23, %s32
      %s43 = sor.u32 %s41, %s42
      %p44 = scmp.eq.s32.totalorder %s43, 0
      %s46 = sadd.s32 %s45, 1
      %s47 = scalar_select %p44, %s45, %s46
      %p50 = pneg %p44
      %p51 = scmp.eq.s32.totalorder %s14, 3
      %p52 = por %p50, %p51
      %p53 = scmp.ne.s32.totalorder %s45, %s48
      %p54 = scmp.eq.s32.totalorder %s14, 0
      %p55 = por %p53, %p54
      %p56 = scmp.ne.s32.totalorder %s45, %s48
      %p57 = scmp.eq.s32.totalorder %s19, 3
      %p58 = por %p56, %p57
      %p59 = scmp.ne.s32.totalorder %s48, %s49
      %p60 = scmp.eq.s32.totalorder %s19, 0
      %p61 = por %p59, %p60
      %p62 = scmp.ne.s32.totalorder %s48, %s49
      %p63 = scmp.eq.s32.totalorder %s20, 3
      %p64 = por %p62, %p63
      %p66 = scmp.ne.s32.totalorder %s49, %s65
      %p67 = scmp.eq.s32.totalorder %s20, 0
      %p68 = por %p66, %p67
      %s69 = sadd.s32 %s23, 1
      %s70 = smul.u32 %s69, 4
      %s71 = sadd.s32 %s32, 1
      %s72 = smul.u32 %s71, 4
      %s73 = ssub.s32 %s21, %s40
      %s74 = ssub.s32 %s70, %s72
      %s75 = sor.u32 %s73, %s74
      %p76 = scmp.eq.s32.totalorder %s75, 0
      %s78 = sadd.s32 %s77, 1
      %s79 = scalar_select %p76, %s77, %s78
      %p82 = pneg %p76
      %p83 = scmp.eq.s32.totalorder %s14, 3
      %p84 = por %p82, %p83
      %p85 = scmp.ne.s32.totalorder %s77, %s80
      %p86 = scmp.eq.s32.totalorder %s14, 0
      %p87 = por %p85, %p86
      %p88 = scmp.ne.s32.totalorder %s77, %s80
      %p89 = scmp.eq.s32.totalorder %s19, 3
      %p90 = por %p88, %p89
      %p91 = scmp.ne.s32.totalorder %s80, %s81
      %p92 = scmp.eq.s32.totalorder %s19, 0
      %p93 = por %p91, %p92
      %p94 = scmp.ne.s32.totalorder %s80, %s81
      %p95 = scmp.eq.s32.totalorder %s20, 3
      %p96 = por %p94, %p95
      %p98 = scmp.ne.s32.totalorder %s81, %s97
      %p99 = scmp.eq.s32.totalorder %s20, 0
      %p100 = por %p98, %p99
      %s101 = ssub.s32 %s22, %s36
      %p102 = scmp.eq.s32.totalorder %s101, 0
      %s104 = sadd.s32 %s103, 1
      %s105 = scalar_select %p102, %s103, %s104
      %p108 = pneg %p102
      %p109 = scmp.eq.s32.totalorder %s14, 3
      %p110 = por %p108, %p109
      %p111 = scmp.ne.s32.totalorder %s103, %s106
      %p112 = scmp.eq.s32.totalorder %s14, 0
      %p113 = por %p111, %p112
      %p114 = scmp.ne.s32.totalorder %s103, %s106
      %p115 = scmp.eq.s32.totalorder %s19, 3
      %p116 = por %p114, %p115
      %p117 = scmp.ne.s32.totalorder %s106, %s107
      %p118 = scmp.eq.s32.totalorder %s19, 0
      %p119 = por %p117, %p118
      %p120 = scmp.ne.s32.totalorder %s106, %s107
      %p121 = scmp.eq.s32.totalorder %s20, 3
      %p122 = por %p120, %p121
      %p124 = scmp.ne.s32.totalorder %s107, %s123
      %p125 = scmp.eq.s32.totalorder %s20, 0
      %p126 = por %p124, %p125
      %s127 = ssub.s32 %s22, %s36
      %p128 = scmp.eq.s32.totalorder %s127, 0
      %s130 = sadd.s32 %s129, 1
      %s131 = scalar_select %p128, %s129, %s130
      %p134 = pneg %p128
      %p135 = scmp.eq.s32.totalorder %s14, 3
      %p136 = por %p134, %p135
      %p137 = scmp.ne.s32.totalorder %s129, %s132
      %p138 = scmp.eq.s32.totalorder %s14, 0
      %p139 = por %p137, %p138
      %p140 = scmp.ne.s32.totalorder %s129, %s132
      %p141 = scmp.eq.s32.totalorder %s19, 3
      %p142 = por %p140, %p141
      %p143 = scmp.ne.s32.totalorder %s132, %s133
      %p144 = scmp.eq.s32.totalorder %s19, 0
      %p145 = por %p143, %p144
      %p146 = scmp.ne.s32.totalorder %s132, %s133
      %p147 = scmp.eq.s32.totalorder %s20, 3
      %p148 = por %p146, %p147
      %p150 = scmp.ne.s32.totalorder %s133, %s149
      %p151 = scmp.eq.s32.totalorder %s20, 0
      %p152 = por %p150, %p151
      %s153 = ssub.s32 %s22, %s36
      %p154 = scmp.eq.s32.totalorder %s153, 0
      %s156 = sadd.s32 %s155, 1
      %s157 = scalar_select %p154, %s155, %s156
      %p160 = pneg %p154
      %p161 = scmp.eq.s32.totalorder %s14, 3
      %p162 = por %p160, %p161
      %p163 = scmp.ne.s32.totalorder %s155, %s158
      %p164 = scmp.eq.s32.totalorder %s14, 0
      %p165 = por %p163, %p164
      %p166 = scmp.ne.s32.totalorder %s155, %s158
      %p167 = scmp.eq.s32.totalorder %s19, 3
      %p168 = por %p166, %p167
      %p169 = scmp.ne.s32.totalorder %s158, %s159
      %p170 = scmp.eq.s32.totalorder %s19, 0
      %p171 = por %p169, %p170
      %p172 = scmp.ne.s32.totalorder %s158, %s159
      %p173 = scmp.eq.s32.totalorder %s20, 3
      %p174 = por %p172, %p173
      %p176 = scmp.ne.s32.totalorder %s159, %s175
      %p177 = scmp.eq.s32.totalorder %s20, 0
      %p178 = por %p176, %p177
      %s179 = ssub.s32 %s21, %s40
      %s180 = ssub.s32 %s23, %s32
      %s181 = sor.u32 %s179, %s180
      %s182 = ssub.s32 %s22, %s36
      %s183 = sor.u32 %s181, %s182
      %p184 = scmp.eq.s32.totalorder %s183, 0
      %s186 = sadd.s32 %s185, 1
      %s187 = scalar_select %p184, %s185, %s186
      %p190 = pneg %p184
      %p191 = scmp.eq.s32.totalorder %s14, 3
      %p192 = por %p190, %p191
      %p193 = scmp.ne.s32.totalorder %s185, %s188
      %p194 = scmp.eq.s32.totalorder %s14, 0
      %p195 = por %p193, %p194
      %p196 = scmp.ne.s32.totalorder %s185, %s188
      %p197 = scmp.eq.s32.totalorder %s19, 3
      %p198 = por %p196, %p197
      %p199 = scmp.ne.s32.totalorder %s188, %s189
      %p200 = scmp.eq.s32.totalorder %s19, 0
      %p201 = por %p199, %p200
      %p202 = scmp.ne.s32.totalorder %s188, %s189
      %p203 = scmp.eq.s32.totalorder %s20, 3
      %p204 = por %p202, %p203
      %p206 = scmp.ne.s32.totalorder %s189, %s205
      %p207 = scmp.eq.s32.totalorder %s20, 0
      %p208 = por %p206, %p207
      %p209 = scmp.le.s32.totalorder 1, %s14
      %p210 = scmp.lt.s32.totalorder %s14, 5
      %p211 = pnand %p209, %p210
      %p212 = pneg %p211
      // Predicated region
      $region9: #{tpu_custom_call.1} parent=5 // pred_check
        _
      $region10: #{tpu_custom_call.1} parent=5 // pred_check_branch
        %214 = sbr.rel (%p211) target = $region12
      $region11: #{tpu_custom_call.1} parent=5 // pred_region
        %s215 = ssub.s32 %s14, 1
        // Predicated region
        $region13: #{tpu_custom_call.1} parent=11 // pred_check
          %p216 = pneg %p119
        $region14: #{tpu_custom_call.1} parent=11 // pred_check_branch
          %218 = sbr.rel (%p216) target = $region16
        $region15: #{tpu_custom_call.1} parent=11 // pred_region
          %p219 = scmp.lt.s32.totalorder %s25, 0
          %s220 = scalar_select %p219, %s25, 0
          %s221 = smul.addr %s220, 4
          %s222 = scalar_lea.vmem %s2, %s221
        $region16: #{tpu_custom_call.1} parent=11 // pred_fallthru
          _
        // Predicated region
        $region17: #{tpu_custom_call.1} parent=11 // pred_check
          %p223 = pneg %p145
        $region18: #{tpu_custom_call.1} parent=11 // pred_check_branch
          %225 = sbr.rel (%p223) target = $region20
        $region19: #{tpu_custom_call.1} parent=11 // pred_region
          %p226 = scmp.lt.s32.totalorder %s25, 0
          %s227 = scalar_select %p226, %s25, 0
          %s228 = scalar_lea.vmem %s3, %s227
        $region20: #{tpu_custom_call.1} parent=11 // pred_fallthru
          _
        // Predicated region
        $region21: #{tpu_custom_call.1} parent=11 // pred_check
          %p229 = pneg %p171
        $region22: #{tpu_custom_call.1} parent=11 // pred_check_branch
          %231 = sbr.rel (%p229) target = $region24
        $region23: #{tpu_custom_call.1} parent=11 // pred_region
          %p232 = scmp.lt.s32.totalorder %s25, 0
          %s233 = scalar_select %p232, %s25, 0
          %s234 = scalar_lea.vmem %s4, %s233
        $region24: #{tpu_custom_call.1} parent=11 // pred_fallthru
          _
      $region12: #{tpu_custom_call.1} parent=5 // pred_fallthru
        _
      %p235 = scmp.lt.s32.totalorder %s14, 4
      // Predicated region
      $region25: #{tpu_custom_call.1} parent=5 // pred_check
        %p236 = pneg %p235
      $region26: #{tpu_custom_call.1} parent=5 // pred_check_branch
        %238 = sbr.rel (%p236) target = $region28
      $region27: #{tpu_custom_call.1} parent=5 // pred_region
        // Predicated region
        $region29: #{tpu_custom_call.1} parent=27 // pred_check
          %p239 = pneg %p55
        $region30: #{tpu_custom_call.1} parent=27 // pred_check_branch
          %241 = sbr.rel (%p239) target = $region32
        $region31: #{tpu_custom_call.1} parent=27 // pred_region
          %s242 = smul.u32 8, %s23
          %p243 = scmp.lt.s32.totalorder %s21, 1
          %s244 = scalar_select %p243, %s21, 1
          %p245 = scmp.lt.s32.totalorder %s242, 23
          %s246 = scalar_select %p245, %s242, 23
          %s247 = smul.addr %s246, 3
          %s248 = smul.addr %s244, 72
          %s249 = sadd.s32 %s247, %s248
          %s250 = smul.addr %s249, 4
          %s251 = scalar_lea.vmem %s0, %s250
          %s252 = smul.u32 8, %s23
        $region32: #{tpu_custom_call.1} parent=27 // pred_fallthru
          _
        // Predicated region
        $region33: #{tpu_custom_call.1} parent=27 // pred_check
          %p253 = pneg %p87
        $region34: #{tpu_custom_call.1} parent=27 // pred_check_branch
          %255 = sbr.rel (%p253) target = $region36
        $region35: #{tpu_custom_call.1} parent=27 // pred_region
          %s256 = sadd.s32 %s23, 1
          %s257 = smul.u32 %s256, 4
          %s258 = smul.u32 2, %s257
          %p259 = scmp.lt.s32.totalorder %s21, 1
          %s260 = scalar_select %p259, %s21, 1
          %p261 = scmp.lt.s32.totalorder %s258, 23
          %s262 = scalar_select %p261, %s258, 23
          %s263 = smul.addr %s262, 3
          %s264 = smul.addr %s260, 72
          %s265 = sadd.s32 %s263, %s264
          %s266 = smul.addr %s265, 4
          %s267 = scalar_lea.vmem %s1, %s266
          %s268 = sadd.s32 %s23, 1
          %s269 = smul.u32 %s268, 4
          %s270 = smul.u32 2, %s269
        $region36: #{tpu_custom_call.1} parent=27 // pred_fallthru
          _
      $region28: #{tpu_custom_call.1} parent=5 // pred_fallthru
        _
      %p271 = scmp.le.s32.totalorder 1, %s14
      %p272 = scmp.lt.s32.totalorder %s14, 5
      %p273 = pnand %p271, %p272
      %p274 = pneg %p273
      // Predicated region
      $region37: #{tpu_custom_call.1} parent=5 // pred_check
        _
      $region38: #{tpu_custom_call.1} parent=5 // pred_check_branch
        %276 = sbr.rel (%p273) target = $region40
      $region39: #{tpu_custom_call.1} parent=5 // pred_region
        %s277 = ssub.s32 %s14, 1
        %s278 = smul.u32 8, %s26
        %p279 = scmp.lt.s32.totalorder %s24, 1
        %s280 = scalar_select %p279, %s24, 1
        %p281 = scmp.lt.s32.totalorder %s278, 23
        %s282 = scalar_select %p281, %s278, 23
        %s283 = smul.addr %s282, 3
        %s284 = smul.addr %s280, 72
        %s285 = sadd.s32 %s283, %s284
        %s286 = smul.addr %s285, 4
        %s287 = scalar_lea.vmem %s0, %s286
        %p288 = pneg %p61
        %p289 = pneg %p58
        %s290 = sadd.s32 %s26, 1
        %s291 = smul.u32 %s290, 4
        %s292 = smul.u32 2, %s291
        %p293 = scmp.lt.s32.totalorder %s24, 1
        %s294 = scalar_select %p293, %s24, 1
        %p295 = scmp.lt.s32.totalorder %s292, 23
        %s296 = scalar_select %p295, %s292, 23
        %s297 = smul.addr %s296, 3
        %s298 = smul.addr %s294, 72
        %s299 = sadd.s32 %s297, %s298
        %s300 = smul.addr %s299, 4
        %s301 = scalar_lea.vmem %s1, %s300
        %p302 = pneg %p93
        %p303 = pneg %p90
        %p304 = scmp.lt.s32.totalorder %s25, 0
        %s305 = scalar_select %p304, %s25, 0
        %s306 = smul.addr %s305, 4
        %s307 = scalar_lea.vmem %s2, %s306
        %p308 = pneg %p119
        %p309 = pneg %p116
        %p310 = scmp.lt.s32.totalorder %s25, 0
        %s311 = scalar_select %p310, %s25, 0
        %s312 = scalar_lea.vmem %s3, %s311
        %p313 = pneg %p145
        %p314 = pneg %p142
        %p315 = scmp.lt.s32.totalorder %s25, 0
        %s316 = scalar_select %p315, %s25, 0
        %s317 = scalar_lea.vmem %s4, %s316
        %p318 = pneg %p171
        %p319 = pneg %p168
        %p320 = pneg %p201
        %p321 = pneg %p198
        %s322 = sand.u32 %s188, 1
        %s323 = scalar_lea.sflag [#allocation4], %s322
        %s324 = sand.u32 %s188, 1
        %s325 = smul.addr %s324, 64
        %s326 = scalar_lea.vmem [#allocation3], %s325
        %s327 = smul.u32 8, %s26
        %p328 = scmp.lt.s32.totalorder %s24, 1
        %s329 = scalar_select %p328, %s24, 1
        %p330 = scmp.lt.s32.totalorder %s327, 23
        %s331 = scalar_select %p330, %s327, 23
        %s332 = smul.addr %s331, 3
        %s333 = smul.addr %s329, 72
        %s334 = sadd.s32 %s332, %s333
        %s335 = smul.addr %s334, 4
        %s336 = scalar_lea.vmem %s0, %s335
        %s337 = smul.u32 8, %s26
        %s338 = sadd.s32 %s26, 1
        %s339 = smul.u32 %s338, 4
        %s340 = smul.u32 2, %s339
        %p341 = scmp.lt.s32.totalorder %s24, 1
        %s342 = scalar_select %p341, %s24, 1
        %p343 = scmp.lt.s32.totalorder %s340, 23
        %s344 = scalar_select %p343, %s340, 23
        %s345 = smul.addr %s344, 3
        %s346 = smul.addr %s342, 72
        %s347 = sadd.s32 %s345, %s346
        %s348 = smul.addr %s347, 4
        %s349 = scalar_lea.vmem %s1, %s348
        %s350 = sadd.s32 %s26, 1
        %s351 = smul.u32 %s350, 4
        %s352 = smul.u32 2, %s351
        %p353 = scmp.lt.s32.totalorder %s25, 0
        %s354 = scalar_select %p353, %s25, 0
        %s355 = smul.addr %s354, 4
        %s356 = scalar_lea.vmem %s2, %s355
        %p357 = scmp.lt.s32.totalorder %s25, 0
        %s358 = scalar_select %p357, %s25, 0
        %s359 = scalar_lea.vmem %s3, %s358
        %p360 = scmp.lt.s32.totalorder %s25, 0
        %s361 = scalar_select %p360, %s25, 0
        %s362 = scalar_lea.vmem %s4, %s361
        %s363 = smul.u32 8, %s26
        %v365 = vld [vmem:[%s336] sm:$0xf]
        %v366 = vld [vmem:[%s336 + $0x4] sm:$0xf]
        %v367 = vld [vmem:[%s336 + $0x8] sm:$0x1]
        %v368 = vld [vmem:[%s336 + $0xc] sm:$0xf]
        %v369 = vld [vmem:[%s336 + $0x10] sm:$0xf]
        %v370 = vld [vmem:[%s336 + $0x14] sm:$0x1]
        %v371 = vld [vmem:[%s336 + $0x18] sm:$0xf]
        %v372 = vld [vmem:[%s336 + $0x1c] sm:$0xf]
        %v373 = vld [vmem:[%s336 + $0x20] sm:$0x1]
        %v374 = vld [vmem:[%s336 + $0x24] sm:$0xf]
        %v375 = vld [vmem:[%s336 + $0x28] sm:$0xf]
        %v376 = vld [vmem:[%s336 + $0x2c] sm:$0x1]
        %v377 = vld [vmem:[%s336 + $0x30] sm:$0xf]
        %v378 = vld [vmem:[%s336 + $0x34] sm:$0xf]
        %v379 = vld [vmem:[%s336 + $0x38] sm:$0x1]
        %v380 = vld [vmem:[%s336 + $0x3c] sm:$0xf]
        %v381 = vld [vmem:[%s336 + $0x40] sm:$0xf]
        %v382 = vld [vmem:[%s336 + $0x44] sm:$0x1]
        %v383 = vld [vmem:[%s336 + $0x48] sm:$0xf]
        %v384 = vld [vmem:[%s336 + $0x4c] sm:$0xf]
        %v385 = vld [vmem:[%s336 + $0x50] sm:$0x1]
        %v386 = vld [vmem:[%s336 + $0x54] sm:$0xf]
        %v387 = vld [vmem:[%s336 + $0x58] sm:$0xf]
        %v388 = vld [vmem:[%s336 + $0x5c] sm:$0x1]
        %v389 = vld [vmem:[%s349] sm:$0xf]
        %v390 = vld [vmem:[%s349 + $0x4] sm:$0xf]
        %v391 = vld [vmem:[%s349 + $0x8] sm:$0x1]
        %v392 = vld [vmem:[%s349 + $0xc] sm:$0xf]
        %v393 = vld [vmem:[%s349 + $0x10] sm:$0xf]
        %v394 = vld [vmem:[%s349 + $0x14] sm:$0x1]
        %v395 = vld [vmem:[%s356] sm:$0xf]
        %v396 = vld [vmem:[%s356 + $0x4] sm:$0xf]
        %v397 = vld [vmem:[%s356 + $0x8] sm:$0xf]
        %v398 = vld [vmem:[%s356 + $0xc] sm:$0xf]
        %v399 = vld [vmem:[%s356 + $0x10] sm:$0xf]
        %v400 = vld [vmem:[%s356 + $0x14] sm:$0xf]
        %v401 = vld [vmem:[%s356 + $0x18] sm:$0xf]
        %v402 = vld [vmem:[%s356 + $0x1c] sm:$0xf]
        %v403 = vld [vmem:[%s356 + $0x20] sm:$0xf]
        %v404 = vld [vmem:[%s356 + $0x24] sm:$0xf]
        %v405 = vld [vmem:[%s356 + $0x28] sm:$0xf]
        %v406 = vld [vmem:[%s356 + $0x2c] sm:$0xf]
        %v423 = vunpack.c.l.b16 %v365
        %v424 = vunpack.c.l.b16 %v366
        %v425 = vunpack.c.l.b16 %v368
        %v426 = vunpack.c.l.b16 %v369
        %v427 = vunpack.c.l.b16 %v371
        %v428 = vunpack.c.l.b16 %v372
        %v429 = vunpack.c.l.b16 %v374
        %v430 = vunpack.c.l.b16 %v375
        %v431 = vunpack.c.l.b16 %v377
        %v432 = vunpack.c.l.b16 %v378
        %v433 = vunpack.c.l.b16 %v380
        %v434 = vunpack.c.l.b16 %v381
        %v435 = vunpack.c.l.b16 %v383
        %v436 = vunpack.c.l.b16 %v384
        %v437 = vunpack.c.l.b16 %v386
        %v438 = vunpack.c.l.b16 %v387
        %v439 = vpack.c.b16 %v424, %v423
        %v440 = vpack.c.b16 %v426, %v425
        %v441 = vpack.c.b16 %v428, %v427
        %v442 = vpack.c.b16 %v430, %v429
        %v443 = vpack.c.b16 %v432, %v431
        %v444 = vpack.c.b16 %v434, %v433
        %v445 = vpack.c.b16 %v436, %v435
        %v446 = vpack.c.b16 %v438, %v437
        %v459 = vunpack.c.l.b16 %v395
        %v460 = vunpack.c.l.b16 %v396
        %v461 = vunpack.c.l.b16 %v397
        %v462 = vunpack.c.l.b16 %v398
        %v463 = vunpack.c.l.b16 %v399
        %v464 = vunpack.c.l.b16 %v400
        %v465 = vunpack.c.l.b16 %v401
        %v466 = vunpack.c.l.b16 %v402
        %v467 = vunpack.c.l.b16 %v403
        %v468 = vunpack.c.l.b16 %v404
        %v469 = vunpack.c.l.b16 %v405
        %v470 = vunpack.c.l.b16 %v406
        %v471 = vpack.c.b16 %v460, %v459
        %v472 = vpack.c.b16 %v462, %v461
        %v473 = vpack.c.b16 %v464, %v463
        %v474 = vpack.c.b16 %v466, %v465
        %v475 = vpack.c.b16 %v468, %v467
        %v476 = vpack.c.b16 %v470, %v469
        %vm483 = vcmask 785408
        %v485 = vsel %vm483, %v439, 0
        %v488 = vsel %vm483, %v440, 0
        %v491 = vsel %vm483, %v441, 0
        %v494 = vsel %vm483, %v442, 0
        %v497 = vsel %vm483, %v443, 0
        %v500 = vsel %vm483, %v444, 0
        %v503 = vsel %vm483, %v445, 0
        %v506 = vsel %vm483, %v446, 0
        %508 = vmatprep.subr.bf16.mxu0 0
        %509 = vmatpush1.bf16.msra.mxu0 %v471
        %510 = vmatprep.subr.bf16.mxu0 0
        %511 = vmatpush1.bf16.msra.mxu0 %v472
        %512 = vmatprep.subr.bf16.mxu0 0
        %513 = vmatpush1.bf16.msra.mxu0 %v473
        %514 = vmatprep.subr.bf16.mxu0 0
        %515 = vmatpush1.bf16.msra.mxu0 %v474
        %516 = vmatprep.subr.bf16.mxu0 0
        %517 = vmatpush1.bf16.msra.mxu0 %v475
        %518 = vmatprep.subr.bf16.mxu0 0
        %519 = vmatpush1.bf16.msra.mxu0 %v476
        %520 = vmatprep.subr.bf16.mxu0 0
        %521 = vmatpush1.bf16.msra.mxu0 0
        %522 = vmatprep.subr.bf16.mxu0 0
        %523 = vmatpush1.bf16.msra.mxu0 0
        %524 = vmatprep.subr.bf16.mxu0 0
        %525 = vmatpush1.bf16.msra.mxu0 0
        %526 = vmatprep.subr.bf16.mxu0 0
        %527 = vmatpush1.bf16.msra.mxu0 0
        %528 = vmatprep.subr.bf16.mxu0 0
        %529 = vmatpush1.bf16.msra.mxu0 0
        %530 = vmatprep.subr.bf16.mxu0 0
        %531 = vmatpush1.bf16.msra.mxu0 0
        %532 = vmatprep.subr.bf16.mxu0 0
        %533 = vmatpush1.bf16.msra.mxu0 0
        %534 = vmatprep.subr.bf16.mxu0 0
        %535 = vmatpush1.bf16.msra.mxu0 0
        %536 = vmatprep.subr.bf16.mxu0 0
        %537 = vmatpush1.bf16.msra.mxu0 0
        %538 = vmatprep.subr.bf16.mxu0 0
        %539 = vmatpush1.bf16.msra.mxu0 0
        %540 = vmatprep.mubr.bf16.mxu0 0
        %541 = vmatmul.mubr.bf16.gmra.mrb[0].mxu0 %v485
        %v542 = vpop.f32.mrb[0].mxu0
        %v543 = vadd.f32 0.0, %v542
        %v544 = vpop.f32.mrb[0].mxu0
        %v545 = vpop.f32.mrb[0].mxu0
        %v546 = vadd.f32 0.0, %v545
        %v547 = vpop.f32.mrb[0].mxu0
        %548 = vmatprep.mubr.bf16.mxu0 0
        %549 = vmatmul.mubr.bf16.gmra.mrb[0].mxu0 %v488
        %v550 = vpop.f32.mrb[0].mxu0
        %v551 = vadd.f32 0.0, %v550
        %v552 = vpop.f32.mrb[0].mxu0
        %v553 = vpop.f32.mrb[0].mxu0
        %v554 = vadd.f32 0.0, %v553
        %v555 = vpop.f32.mrb[0].mxu0
        %556 = vmatprep.mubr.bf16.mxu0 0
        %557 = vmatmul.mubr.bf16.gmra.mrb[0].mxu0 %v491
        %v558 = vpop.f32.mrb[0].mxu0
        %v559 = vadd.f32 0.0, %v558
        %v560 = vpop.f32.mrb[0].mxu0
        %v561 = vpop.f32.mrb[0].mxu0
        %v562 = vadd.f32 0.0, %v561
        %v563 = vpop.f32.mrb[0].mxu0
        %564 = vmatprep.mubr.bf16.mxu0 0
        %565 = vmatmul.mubr.bf16.gmra.mrb[0].mxu0 %v494
        %v566 = vpop.f32.mrb[0].mxu0
        %v567 = vadd.f32 0.0, %v566
        %v568 = vpop.f32.mrb[0].mxu0
        %v569 = vpop.f32.mrb[0].mxu0
        %v570 = vadd.f32 0.0, %v569
        %v571 = vpop.f32.mrb[0].mxu0
        %572 = vmatprep.mubr.bf16.mxu0 0
        %573 = vmatmul.mubr.bf16.gmra.mrb[0].mxu0 %v497
        %v574 = vpop.f32.mrb[0].mxu0
        %v575 = vadd.f32 0.0, %v574
        %v576 = vpop.f32.mrb[0].mxu0
        %v577 = vpop.f32.mrb[0].mxu0
        %v578 = vadd.f32 0.0, %v577
        %v579 = vpop.f32.mrb[0].mxu0
        %580 = vmatprep.mubr.bf16.mxu0 0
        %581 = vmatmul.mubr.bf16.gmra.mrb[0].mxu0 %v500
        %v582 = vpop.f32.mrb[0].mxu0
        %v583 = vadd.f32 0.0, %v582
        %v584 = vpop.f32.mrb[0].mxu0
        %v585 = vpop.f32.mrb[0].mxu0
        %v586 = vadd.f32 0.0, %v585
        %v587 = vpop.f32.mrb[0].mxu0
        %588 = vmatprep.mubr.bf16.mxu0 0
        %589 = vmatmul.mubr.bf16.gmra.mrb[0].mxu0 %v503
        %v590 = vpop.f32.mrb[0].mxu0
        %v591 = vadd.f32 0.0, %v590
        %v592 = vpop.f32.mrb[0].mxu0
        %v593 = vpop.f32.mrb[0].mxu0
        %v594 = vadd.f32 0.0, %v593
        %v595 = vpop.f32.mrb[0].mxu0
        %596 = vmatprep.mubr.bf16.mxu0 0
        %597 = vmatmul.mubr.bf16.gmra.mrb[0].mxu0 %v506
        %v598 = vpop.f32.mrb[0].mxu0
        %v599 = vadd.f32 0.0, %v598
        %v600 = vpop.f32.mrb[0].mxu0
        %v601 = vpop.f32.mrb[0].mxu0
        %v602 = vadd.f32 0.0, %v601
        %v603 = vpop.f32.mrb[0].mxu0
        %604 = vdwg.mxu0
        %605 = vst [vmem:[#allocation2] sm:$0xff] %v543
        %606 = vst [vmem:[#allocation2 + $0x8] sm:$0xff] %v546
        %607 = vst [vmem:[#allocation2 + $0x10] sm:$0xff] %v551
        %608 = vst [vmem:[#allocation2 + $0x18] sm:$0xff] %v554
        %609 = vst [vmem:[#allocation2 + $0x20] sm:$0xff] %v559
        %610 = vst [vmem:[#allocation2 + $0x28] sm:$0xff] %v562
        %611 = vst [vmem:[#allocation2 + $0x30] sm:$0xff] %v567
        %612 = vst [vmem:[#allocation2 + $0x38] sm:$0xff] %v570
        %613 = vst [vmem:[#allocation2 + $0x40] sm:$0xff] %v575
        %614 = vst [vmem:[#allocation2 + $0x48] sm:$0xff] %v578
        %615 = vst [vmem:[#allocation2 + $0x50] sm:$0xff] %v583
        %616 = vst [vmem:[#allocation2 + $0x58] sm:$0xff] %v586
        %617 = vst [vmem:[#allocation2 + $0x60] sm:$0xff] %v591
        %618 = vst [vmem:[#allocation2 + $0x68] sm:$0xff] %v594
        %619 = vst [vmem:[#allocation2 + $0x70] sm:$0xff] %v599
        %620 = vst [vmem:[#allocation2 + $0x78] sm:$0xff] %v602
        %vm621 = vsmask.f32 3328
        %vm622 = vsmask.f32 7440
        %vm623 = vmor %vm621, %vm622
        %v625 = vshrl.u32 %v365, 16
        %v627 = vrot.slane %v625, 4
        %v628 = vshll.u32 %v365, 16
        %v630 = vrot.slane %v628, 5
        %v631 = vor.u32 %v627, %v630
        %v632 = vrot.slane %v631, 4
        %v634 = vshll.u32 %v366, 16
        %v636 = vrot.slane %v634, 5
        %v637 = vsel %vm623, %v632, %v636
        %v638 = vshrl.u32 %v366, 16
        %v640 = vrot.slane %v638, 4
        %v641 = vor.u32 %v640, %v636
        %v642 = vrot.slane %v641, 4
        %v644 = vshll.u32 %v367, 16
        %v646 = vrot.slane %v644, 5
        %v647 = vsel %vm623, %v642, %v646
        %v649 = vshrl.u32 %v368, 16
        %v651 = vrot.slane %v649, 4
        %v652 = vshll.u32 %v368, 16
        %v654 = vrot.slane %v652, 5
        %v655 = vor.u32 %v651, %v654
        %v656 = vrot.slane %v655, 4
        %v658 = vshll.u32 %v369, 16
        %v660 = vrot.slane %v658, 5
        %v661 = vsel %vm623, %v656, %v660
        %v662 = vshrl.u32 %v369, 16
        %v664 = vrot.slane %v662, 4
        %v665 = vor.u32 %v664, %v660
        %v666 = vrot.slane %v665, 4
        %v668 = vshll.u32 %v370, 16
        %v670 = vrot.slane %v668, 5
        %v671 = vsel %vm623, %v666, %v670
        %v673 = vshrl.u32 %v371, 16
        %v675 = vrot.slane %v673, 4
        %v676 = vshll.u32 %v371, 16
        %v678 = vrot.slane %v676, 5
        %v679 = vor.u32 %v675, %v678
        %v680 = vrot.slane %v679, 4
        %v682 = vshll.u32 %v372, 16
        %v684 = vrot.slane %v682, 5
        %v685 = vsel %vm623, %v680, %v684
        %v686 = vshrl.u32 %v372, 16
        %v688 = vrot.slane %v686, 4
        %v689 = vor.u32 %v688, %v684
        %v690 = vrot.slane %v689, 4
        %v692 = vshll.u32 %v373, 16
        %v694 = vrot.slane %v692, 5
        %v695 = vsel %vm623, %v690, %v694
        %v697 = vshrl.u32 %v374, 16
        %v699 = vrot.slane %v697, 4
        %v700 = vshll.u32 %v374, 16
        %v702 = vrot.slane %v700, 5
        %v703 = vor.u32 %v699, %v702
        %v704 = vrot.slane %v703, 4
        %v706 = vshll.u32 %v375, 16
        %v708 = vrot.slane %v706, 5
        %v709 = vsel %vm623, %v704, %v708
        %v710 = vshrl.u32 %v375, 16
        %v712 = vrot.slane %v710, 4
        %v713 = vor.u32 %v712, %v708
        %v714 = vrot.slane %v713, 4
        %v716 = vshll.u32 %v376, 16
        %v718 = vrot.slane %v716, 5
        %v719 = vsel %vm623, %v714, %v718
        %v721 = vshrl.u32 %v377, 16
        %v723 = vrot.slane %v721, 4
        %v724 = vshll.u32 %v377, 16
        %v726 = vrot.slane %v724, 5
        %v727 = vor.u32 %v723, %v726
        %v728 = vrot.slane %v727, 4
        %v730 = vshll.u32 %v378, 16
        %v732 = vrot.slane %v730, 5
        %v733 = vsel %vm623, %v728, %v732
        %v734 = vshrl.u32 %v378, 16
        %v736 = vrot.slane %v734, 4
        %v737 = vor.u32 %v736, %v732
        %v738 = vrot.slane %v737, 4
        %v740 = vshll.u32 %v379, 16
        %v742 = vrot.slane %v740, 5
        %v743 = vsel %vm623, %v738, %v742
        %v745 = vshrl.u32 %v380, 16
        %v747 = vrot.slane %v745, 4
        %v748 = vshll.u32 %v380, 16
        %v750 = vrot.slane %v748, 5
        %v751 = vor.u32 %v747, %v750
        %v752 = vrot.slane %v751, 4
        %v754 = vshll.u32 %v381, 16
        %v756 = vrot.slane %v754, 5
        %v757 = vsel %vm623, %v752, %v756
        %v758 = vshrl.u32 %v381, 16
        %v760 = vrot.slane %v758, 4
        %v761 = vor.u32 %v760, %v756
        %v762 = vrot.slane %v761, 4
        %v764 = vshll.u32 %v382, 16
        %v766 = vrot.slane %v764, 5
        %v767 = vsel %vm623, %v762, %v766
        %v769 = vshrl.u32 %v383, 16
        %v771 = vrot.slane %v769, 4
        %v772 = vshll.u32 %v383, 16
        %v774 = vrot.slane %v772, 5
        %v775 = vor.u32 %v771, %v774
        %v776 = vrot.slane %v775, 4
        %v778 = vshll.u32 %v384, 16
        %v780 = vrot.slane %v778, 5
        %v781 = vsel %vm623, %v776, %v780
        %v782 = vshrl.u32 %v384, 16
        %v784 = vrot.slane %v782, 4
        %v785 = vor.u32 %v784, %v780
        %v786 = vrot.slane %v785, 4
        %v788 = vshll.u32 %v385, 16
        %v790 = vrot.slane %v788, 5
        %v791 = vsel %vm623, %v786, %v790
        %v793 = vshrl.u32 %v386, 16
        %v795 = vrot.slane %v793, 4
        %v796 = vshll.u32 %v386, 16
        %v798 = vrot.slane %v796, 5
        %v799 = vor.u32 %v795, %v798
        %v800 = vrot.slane %v799, 4
        %v802 = vshll.u32 %v387, 16
        %v804 = vrot.slane %v802, 5
        %v805 = vsel %vm623, %v800, %v804
        %v806 = vshrl.u32 %v387, 16
        %v808 = vrot.slane %v806, 4
        %v809 = vor.u32 %v808, %v804
        %v810 = vrot.slane %v809, 4
        %v812 = vshll.u32 %v388, 16
        %v814 = vrot.slane %v812, 5
        %v815 = vsel %vm623, %v810, %v814
        %s816 = scalar_lea.vmem %s356, 48
        %v817 = vld [vmem:[%s816] sm:$0xf]
        %v818 = vld [vmem:[%s816 + $0x4] sm:$0xf]
        %v819 = vld [vmem:[%s816 + $0x8] sm:$0xf]
        %v820 = vld [vmem:[%s816 + $0xc] sm:$0xf]
        %v821 = vld [vmem:[%s816 + $0x10] sm:$0xf]
        %v822 = vld [vmem:[%s816 + $0x14] sm:$0xf]
        %v823 = vld [vmem:[%s816 + $0x18] sm:$0xf]
        %v824 = vld [vmem:[%s816 + $0x1c] sm:$0xf]
        %v825 = vld [vmem:[%s816 + $0x20] sm:$0xf]
        %v826 = vld [vmem:[%s816 + $0x24] sm:$0xf]
        %v827 = vld [vmem:[%s816 + $0x28] sm:$0xf]
        %v828 = vld [vmem:[%s816 + $0x2c] sm:$0xf]
        %v829 = vunpack.c.l.b16 %v637
        %v830 = vunpack.c.l.b16 %v647
        %v831 = vunpack.c.l.b16 %v661
        %v832 = vunpack.c.l.b16 %v671
        %v833 = vunpack.c.l.b16 %v685
        %v834 = vunpack.c.l.b16 %v695
        %v835 = vunpack.c.l.b16 %v709
        %v836 = vunpack.c.l.b16 %v719
        %v837 = vunpack.c.l.b16 %v733
        %v838 = vunpack.c.l.b16 %v743
        %v839 = vunpack.c.l.b16 %v757
        %v840 = vunpack.c.l.b16 %v767
        %v841 = vunpack.c.l.b16 %v781
        %v842 = vunpack.c.l.b16 %v791
        %v843 = vunpack.c.l.b16 %v805
        %v844 = vunpack.c.l.b16 %v815
        %v845 = vpack.c.b16 %v830, %v829
        %v846 = vpack.c.b16 %v832, %v831
        %v847 = vpack.c.b16 %v834, %v833
        %v848 = vpack.c.b16 %v836, %v835
        %v849 = vpack.c.b16 %v838, %v837
        %v850 = vpack.c.b16 %v840, %v839
        %v851 = vpack.c.b16 %v842, %v841
        %v852 = vpack.c.b16 %v844, %v843
        %v865 = vunpack.c.l.b16 %v817
        %v866 = vunpack.c.l.b16 %v818
        %v867 = vunpack.c.l.b16 %v819
        %v868 = vunpack.c.l.b16 %v820
        %v869 = vunpack.c.l.b16 %v821
        %v870 = vunpack.c.l.b16 %v822
        %v871 = vunpack.c.l.b16 %v823
        %v872 = vunpack.c.l.b16 %v824
        %v873 = vunpack.c.l.b16 %v825
        %v874 = vunpack.c.l.b16 %v826
        %v875 = vunpack.c.l.b16 %v827
        %v876 = vunpack.c.l.b16 %v828
        %v877 = vpack.c.b16 %v866, %v865
        %v878 = vpack.c.b16 %v868, %v867
        %v879 = vpack.c.b16 %v870, %v869
        %v880 = vpack.c.b16 %v872, %v871
        %v881 = vpack.c.b16 %v874, %v873
        %v882 = vpack.c.b16 %v876, %v875
        %v890 = vsel %vm483, %v845, 0
        %v893 = vsel %vm483, %v846, 0
        %v896 = vsel %vm483, %v847, 0
        %v899 = vsel %vm483, %v848, 0
        %v902 = vsel %vm483, %v849, 0
        %v905 = vsel %vm483, %v850, 0
        %v908 = vsel %vm483, %v851, 0
        %v911 = vsel %vm483, %v852, 0
        %913 = vmatprep.subr.bf16.mxu0 0
        %914 = vmatpush1.bf16.msra.mxu0 %v877
        %915 = vmatprep.subr.bf16.mxu0 0
        %916 = vmatpush1.bf16.msra.mxu0 %v878
        %917 = vmatprep.subr.bf16.mxu0 0
        %918 = vmatpush1.bf16.msra.mxu0 %v879
        %919 = vmatprep.subr.bf16.mxu0 0
        %920 = vmatpush1.bf16.msra.mxu0 %v880
        %921 = vmatprep.subr.bf16.mxu0 0
        %922 = vmatpush1.bf16.msra.mxu0 %v881
        %923 = vmatprep.subr.bf16.mxu0 0
        %924 = vmatpush1.bf16.msra.mxu0 %v882
        %925 = vmatprep.subr.bf16.mxu0 0
        %926 = vmatpush1.bf16.msra.mxu0 0
        %927 = vmatprep.subr.bf16.mxu0 0
        %928 = vmatpush1.bf16.msra.mxu0 0
        %929 = vmatprep.subr.bf16.mxu0 0
        %930 = vmatpush1.bf16.msra.mxu0 0
        %931 = vmatprep.subr.bf16.mxu0 0
        %932 = vmatpush1.bf16.msra.mxu0 0
        %933 = vmatprep.subr.bf16.mxu0 0
        %934 = vmatpush1.bf16.msra.mxu0 0
        %935 = vmatprep.subr.bf16.mxu0 0
        %936 = vmatpush1.bf16.msra.mxu0 0
        %937 = vmatprep.subr.bf16.mxu0 0
        %938 = vmatpush1.bf16.msra.mxu0 0
        %939 = vmatprep.subr.bf16.mxu0 0
        %940 = vmatpush1.bf16.msra.mxu0 0
        %941 = vmatprep.subr.bf16.mxu0 0
        %942 = vmatpush1.bf16.msra.mxu0 0
        %943 = vmatprep.subr.bf16.mxu0 0
        %944 = vmatpush1.bf16.msra.mxu0 0
        %945 = vmatprep.mubr.bf16.mxu0 0
        %946 = vmatmul.mubr.bf16.gmra.mrb[0].mxu0 %v890
        %v947 = vpop.f32.mrb[0].mxu0
        %v948 = vadd.f32 0.0, %v947
        %v949 = vpop.f32.mrb[0].mxu0
        %v950 = vpop.f32.mrb[0].mxu0
        %v951 = vadd.f32 0.0, %v950
        %v952 = vpop.f32.mrb[0].mxu0
        %953 = vmatprep.mubr.bf16.mxu0 0
        %954 = vmatmul.mubr.bf16.gmra.mrb[0].mxu0 %v893
        %v955 = vpop.f32.mrb[0].mxu0
        %v956 = vadd.f32 0.0, %v955
        %v957 = vpop.f32.mrb[0].mxu0
        %v958 = vpop.f32.mrb[0].mxu0
        %v959 = vadd.f32 0.0, %v958
        %v960 = vpop.f32.mrb[0].mxu0
        %961 = vmatprep.mubr.bf16.mxu0 0
        %962 = vmatmul.mubr.bf16.gmra.mrb[0].mxu0 %v896
        %v963 = vpop.f32.mrb[0].mxu0
        %v964 = vadd.f32 0.0, %v963
        %v965 = vpop.f32.mrb[0].mxu0
        %v966 = vpop.f32.mrb[0].mxu0
        %v967 = vadd.f32 0.0, %v966
        %v968 = vpop.f32.mrb[0].mxu0
        %969 = vmatprep.mubr.bf16.mxu0 0
        %970 = vmatmul.mubr.bf16.gmra.mrb[0].mxu0 %v899
        %v971 = vpop.f32.mrb[0].mxu0
        %v972 = vadd.f32 0.0, %v971
        %v973 = vpop.f32.mrb[0].mxu0
        %v974 = vpop.f32.mrb[0].mxu0
        %v975 = vadd.f32 0.0, %v974
        %v976 = vpop.f32.mrb[0].mxu0
        %977 = vmatprep.mubr.bf16.mxu0 0
        %978 = vmatmul.mubr.bf16.gmra.mrb[0].mxu0 %v902
        %v979 = vpop.f32.mrb[0].mxu0
        %v980 = vadd.f32 0.0, %v979
        %v981 = vpop.f32.mrb[0].mxu0
        %v982 = vpop.f32.mrb[0].mxu0
        %v983 = vadd.f32 0.0, %v982
        %v984 = vpop.f32.mrb[0].mxu0
        %985 = vmatprep.mubr.bf16.mxu0 0
        %986 = vmatmul.mubr.bf16.gmra.mrb[0].mxu0 %v905
        %v987 = vpop.f32.mrb[0].mxu0
        %v988 = vadd.f32 0.0, %v987
        %v989 = vpop.f32.mrb[0].mxu0
        %v990 = vpop.f32.mrb[0].mxu0
        %v991 = vadd.f32 0.0, %v990
        %v992 = vpop.f32.mrb[0].mxu0
        %993 = vmatprep.mubr.bf16.mxu0 0
        %994 = vmatmul.mubr.bf16.gmra.mrb[0].mxu0 %v908
        %v995 = vpop.f32.mrb[0].mxu0
        %v996 = vadd.f32 0.0, %v995
        %v997 = vpop.f32.mrb[0].mxu0
        %v998 = vpop.f32.mrb[0].mxu0
        %v999 = vadd.f32 0.0, %v998
        %v1000 = vpop.f32.mrb[0].mxu0
        %1001 = vmatprep.mubr.bf16.mxu0 0
        %1002 = vmatmul.mubr.bf16.gmra.mrb[0].mxu0 %v911
        %v1003 = vpop.f32.mrb[0].mxu0
        %v1004 = vadd.f32 0.0, %v1003
        %v1005 = vpop.f32.mrb[0].mxu0
        %v1006 = vpop.f32.mrb[0].mxu0
        %v1007 = vadd.f32 0.0, %v1006
        %v1008 = vpop.f32.mrb[0].mxu0
        %1009 = vdwg.mxu0
        %v1010 = vld [vmem:[#allocation2] sm:$0xff]
        %v1011 = vld [vmem:[#allocation2 + $0x8] sm:$0xff]
        %v1012 = vld [vmem:[#allocation2 + $0x10] sm:$0xff]
        %v1013 = vld [vmem:[#allocation2 + $0x18] sm:$0xff]
        %v1014 = vld [vmem:[#allocation2 + $0x20] sm:$0xff]
        %v1015 = vld [vmem:[#allocation2 + $0x28] sm:$0xff]
        %v1016 = vld [vmem:[#allocation2 + $0x30] sm:$0xff]
        %v1017 = vld [vmem:[#allocation2 + $0x38] sm:$0xff]
        %v1018 = vld [vmem:[#allocation2 + $0x40] sm:$0xff]
        %v1019 = vld [vmem:[#allocation2 + $0x48] sm:$0xff]
        %v1020 = vld [vmem:[#allocation2 + $0x50] sm:$0xff]
        %v1021 = vld [vmem:[#allocation2 + $0x58] sm:$0xff]
        %v1022 = vld [vmem:[#allocation2 + $0x60] sm:$0xff]
        %v1023 = vld [vmem:[#allocation2 + $0x68] sm:$0xff]
        %v1024 = vld [vmem:[#allocation2 + $0x70] sm:$0xff]
        %v1025 = vld [vmem:[#allocation2 + $0x78] sm:$0xff]
        %v1026 = vadd.f32 %v1010, %v948
        %v1027 = vadd.f32 %v1011, %v951
        %v1028 = vadd.f32 %v1012, %v956
        %v1029 = vadd.f32 %v1013, %v959
        %v1030 = vadd.f32 %v1014, %v964
        %v1031 = vadd.f32 %v1015, %v967
        %v1032 = vadd.f32 %v1016, %v972
        %v1033 = vadd.f32 %v1017, %v975
        %v1034 = vadd.f32 %v1018, %v980
        %v1035 = vadd.f32 %v1019, %v983
        %v1036 = vadd.f32 %v1020, %v988
        %v1037 = vadd.f32 %v1021, %v991
        %v1038 = vadd.f32 %v1022, %v996
        %v1039 = vadd.f32 %v1023, %v999
        %v1040 = vadd.f32 %v1024, %v1004
        %v1041 = vadd.f32 %v1025, %v1007
        %1042 = vst [vmem:[#allocation2] sm:$0xff] %v1026
        %1043 = vst [vmem:[#allocation2 + $0x8] sm:$0xff] %v1027
        %1044 = vst [vmem:[#allocation2 + $0x10] sm:$0xff] %v1028
        %1045 = vst [vmem:[#allocation2 + $0x18] sm:$0xff] %v1029
        %1046 = vst [vmem:[#allocation2 + $0x20] sm:$0xff] %v1030
        %1047 = vst [vmem:[#allocation2 + $0x28] sm:$0xff] %v1031
        %1048 = vst [vmem:[#allocation2 + $0x30] sm:$0xff] %v1032
        %1049 = vst [vmem:[#allocation2 + $0x38] sm:$0xff] %v1033
        %1050 = vst [vmem:[#allocation2 + $0x40] sm:$0xff] %v1034
        %1051 = vst [vmem:[#allocation2 + $0x48] sm:$0xff] %v1035
        %1052 = vst [vmem:[#allocation2 + $0x50] sm:$0xff] %v1036
        %1053 = vst [vmem:[#allocation2 + $0x58] sm:$0xff] %v1037
        %1054 = vst [vmem:[#allocation2 + $0x60] sm:$0xff] %v1038
        %1055 = vst [vmem:[#allocation2 + $0x68] sm:$0xff] %v1039
        %1056 = vst [vmem:[#allocation2 + $0x70] sm:$0xff] %v1040
        %1057 = vst [vmem:[#allocation2 + $0x78] sm:$0xff] %v1041
        %vm1066 = vcmask 1042432
        %vm1067 = vcmask 1046532
        %vm1068 = vmor %vm1066, %vm1067
        %v1069 = vrot.slane %v365, 5
        %v1070 = vrot.slane %v1069, 4
        %v1071 = vrot.slane %v366, 5
        %v1072 = vsel %vm1068, %v1070, %v1071
        %v1073 = vrot.slane %v1071, 4
        %v1074 = vrot.slane %v367, 5
        %v1075 = vsel %vm1068, %v1073, %v1074
        %v1076 = vrot.slane %v368, 5
        %v1077 = vrot.slane %v1076, 4
        %v1078 = vrot.slane %v369, 5
        %v1079 = vsel %vm1068, %v1077, %v1078
        %v1080 = vrot.slane %v1078, 4
        %v1081 = vrot.slane %v370, 5
        %v1082 = vsel %vm1068, %v1080, %v1081
        %v1083 = vrot.slane %v371, 5
        %v1084 = vrot.slane %v1083, 4
        %v1085 = vrot.slane %v372, 5
        %v1086 = vsel %vm1068, %v1084, %v1085
        %v1087 = vrot.slane %v1085, 4
        %v1088 = vrot.slane %v373, 5
        %v1089 = vsel %vm1068, %v1087, %v1088
        %v1090 = vrot.slane %v374, 5
        %v1091 = vrot.slane %v1090, 4
        %v1092 = vrot.slane %v375, 5
        %v1093 = vsel %vm1068, %v1091, %v1092
        %v1094 = vrot.slane %v1092, 4
        %v1095 = vrot.slane %v376, 5
        %v1096 = vsel %vm1068, %v1094, %v1095
        %v1097 = vrot.slane %v377, 5
        %v1098 = vrot.slane %v1097, 4
        %v1099 = vrot.slane %v378, 5
        %v1100 = vsel %vm1068, %v1098, %v1099
        %v1101 = vrot.slane %v1099, 4
        %v1102 = vrot.slane %v379, 5
        %v1103 = vsel %vm1068, %v1101, %v1102
        %v1104 = vrot.slane %v380, 5
        %v1105 = vrot.slane %v1104, 4
        %v1106 = vrot.slane %v381, 5
        %v1107 = vsel %vm1068, %v1105, %v1106
        %v1108 = vrot.slane %v1106, 4
        %v1109 = vrot.slane %v382, 5
        %v1110 = vsel %vm1068, %v1108, %v1109
        %v1111 = vrot.slane %v383, 5
        %v1112 = vrot.slane %v1111, 4
        %v1113 = vrot.slane %v384, 5
        %v1114 = vsel %vm1068, %v1112, %v1113
        %v1115 = vrot.slane %v1113, 4
        %v1116 = vrot.slane %v385, 5
        %v1117 = vsel %vm1068, %v1115, %v1116
        %v1118 = vrot.slane %v386, 5
        %v1119 = vrot.slane %v1118, 4
        %v1120 = vrot.slane %v387, 5
        %v1121 = vsel %vm1068, %v1119, %v1120
        %v1122 = vrot.slane %v1120, 4
        %v1123 = vrot.slane %v388, 5
        %v1124 = vsel %vm1068, %v1122, %v1123
        %s1125 = scalar_lea.vmem %s356, 96
        %v1126 = vld [vmem:[%s1125] sm:$0xf]
        %v1127 = vld [vmem:[%s1125 + $0x4] sm:$0xf]
        %v1128 = vld [vmem:[%s1125 + $0x8] sm:$0xf]
        %v1129 = vld [vmem:[%s1125 + $0xc] sm:$0xf]
        %v1130 = vld [vmem:[%s1125 + $0x10] sm:$0xf]
        %v1131 = vld [vmem:[%s1125 + $0x14] sm:$0xf]
        %v1132 = vld [vmem:[%s1125 + $0x18] sm:$0xf]
        %v1133 = vld [vmem:[%s1125 + $0x1c] sm:$0xf]
        %v1134 = vld [vmem:[%s1125 + $0x20] sm:$0xf]
        %v1135 = vld [vmem:[%s1125 + $0x24] sm:$0xf]
        %v1136 = vld [vmem:[%s1125 + $0x28] sm:$0xf]
        %v1137 = vld [vmem:[%s1125 + $0x2c] sm:$0xf]
        %v1138 = vunpack.c.l.b16 %v1072
        %v1139 = vunpack.c.l.b16 %v1075
        %v1140 = vunpack.c.l.b16 %v1079
        %v1141 = vunpack.c.l.b16 %v1082
        %v1142 = vunpack.c.l.b16 %v1086
        %v1143 = vunpack.c.l.b16 %v1089
        %v1144 = vunpack.c.l.b16 %v1093
        %v1145 = vunpack.c.l.b16 %v1096
        %v1146 = vunpack.c.l.b16 %v1100
        %v1147 = vunpack.c.l.b16 %v1103
        %v1148 = vunpack.c.l.b16 %v1107
        %v1149 = vunpack.c.l.b16 %v1110
        %v1150 = vunpack.c.l.b16 %v1114
        %v1151 = vunpack.c.l.b16 %v1117
        %v1152 = vunpack.c.l.b16 %v1121
        %v1153 = vunpack.c.l.b16 %v1124
        %v1154 = vpack.c.b16 %v1139, %v1138
        %v1155 = vpack.c.b16 %v1141, %v1140
        %v1156 = vpack.c.b16 %v1143, %v1142
        %v1157 = vpack.c.b16 %v1145, %v1144
        %v1158 = vpack.c.b16 %v1147, %v1146
        %v1159 = vpack.c.b16 %v1149, %v1148
        %v1160 = vpack.c.b16 %v1151, %v1150
        %v1161 = vpack.c.b16 %v1153, %v1152
        %v1174 = vunpack.c.l.b16 %v1126
        %v1175 = vunpack.c.l.b16 %v1127
        %v1176 = vunpack.c.l.b16 %v1128
        %v1177 = vunpack.c.l.b16 %v1129
        %v1178 = vunpack.c.l.b16 %v1130
        %v1179 = vunpack.c.l.b16 %v1131
        %v1180 = vunpack.c.l.b16 %v1132
        %v1181 = vunpack.c.l.b16 %v1133
        %v1182 = vunpack.c.l.b16 %v1134
        %v1183 = vunpack.c.l.b16 %v1135
        %v1184 = vunpack.c.l.b16 %v1136
        %v1185 = vunpack.c.l.b16 %v1137
        %v1186 = vpack.c.b16 %v1175, %v1174
        %v1187 = vpack.c.b16 %v1177, %v1176
        %v1188 = vpack.c.b16 %v1179, %v1178
        %v1189 = vpack.c.b16 %v1181, %v1180
        %v1190 = vpack.c.b16 %v1183, %v1182
        %v1191 = vpack.c.b16 %v1185, %v1184
        %v1199 = vsel %vm483, %v1154, 0
        %v1202 = vsel %vm483, %v1155, 0
        %v1205 = vsel %vm483, %v1156, 0
        %v1208 = vsel %vm483, %v1157, 0
        %v1211 = vsel %vm483, %v1158, 0
        %v1214 = vsel %vm483, %v1159, 0
        %v1217 = vsel %vm483, %v1160, 0
        %v1220 = vsel %vm483, %v1161, 0
        %1222 = vmatprep.subr.bf16.mxu0 0
        %1223 = vmatpush1.bf16.msra.mxu0 %v1186
        %1224 = vmatprep.subr.bf16.mxu0 0
        %1225 = vmatpush1.bf16.msra.mxu0 %v1187
        %1226 = vmatprep.subr.bf16.mxu0 0
        %1227 = vmatpush1.bf16.msra.mxu0 %v1188
        %1228 = vmatprep.subr.bf16.mxu0 0
        %1229 = vmatpush1.bf16.msra.mxu0 %v1189
        %1230 = vmatprep.subr.bf16.mxu0 0
        %1231 = vmatpush1.bf16.msra.mxu0 %v1190
        %1232 = vmatprep.subr.bf16.mxu0 0
        %1233 = vmatpush1.bf16.msra.mxu0 %v1191
        %1234 = vmatprep.subr.bf16.mxu0 0
        %1235 = vmatpush1.bf16.msra.mxu0 0
        %1236 = vmatprep.subr.bf16.mxu0 0
        %1237 = vmatpush1.bf16.msra.mxu0 0
        %1238 = vmatprep.subr.bf16.mxu0 0
        %1239 = vmatpush1.bf16.msra.mxu0 0
        %1240 = vmatprep.subr.bf16.mxu0 0
        %1241 = vmatpush1.bf16.msra.mxu0 0
        %1242 = vmatprep.subr.bf16.mxu0 0
        %1243 = vmatpush1.bf16.msra.mxu0 0
        %1244 = vmatprep.subr.bf16.mxu0 0
        %1245 = vmatpush1.bf16.msra.mxu0 0
        %1246 = vmatprep.subr.bf16.mxu0 0
        %1247 = vmatpush1.bf16.msra.mxu0 0
        %1248 = vmatprep.subr.bf16.mxu0 0
        %1249 = vmatpush1.bf16.msra.mxu0 0
        %1250 = vmatprep.subr.bf16.mxu0 0
        %1251 = vmatpush1.bf16.msra.mxu0 0
        %1252 = vmatprep.subr.bf16.mxu0 0
        %1253 = vmatpush1.bf16.msra.mxu0 0
        %1254 = vmatprep.mubr.bf16.mxu0 0
        %1255 = vmatmul.mubr.bf16.gmra.mrb[0].mxu0 %v1199
        %v1256 = vpop.f32.mrb[0].mxu0
        %v1257 = vadd.f32 0.0, %v1256
        %v1258 = vpop.f32.mrb[0].mxu0
        %v1259 = vpop.f32.mrb[0].mxu0
        %v1260 = vadd.f32 0.0, %v1259
        %v1261 = vpop.f32.mrb[0].mxu0
        %1262 = vmatprep.mubr.bf16.mxu0 0
        %1263 = vmatmul.mubr.bf16.gmra.mrb[0].mxu0 %v1202
        %v1264 = vpop.f32.mrb[0].mxu0
        %v1265 = vadd.f32 0.0, %v1264
        %v1266 = vpop.f32.mrb[0].mxu0
        %v1267 = vpop.f32.mrb[0].mxu0
        %v1268 = vadd.f32 0.0, %v1267
        %v1269 = vpop.f32.mrb[0].mxu0
        %1270 = vmatprep.mubr.bf16.mxu0 0
        %1271 = vmatmul.mubr.bf16.gmra.mrb[0].mxu0 %v1205
        %v1272 = vpop.f32.mrb[0].mxu0
        %v1273 = vadd.f32 0.0, %v1272
        %v1274 = vpop.f32.mrb[0].mxu0
        %v1275 = vpop.f32.mrb[0].mxu0
        %v1276 = vadd.f32 0.0, %v1275
        %v1277 = vpop.f32.mrb[0].mxu0
        %1278 = vmatprep.mubr.bf16.mxu0 0
        %1279 = vmatmul.mubr.bf16.gmra.mrb[0].mxu0 %v1208
        %v1280 = vpop.f32.mrb[0].mxu0
        %v1281 = vadd.f32 0.0, %v1280
        %v1282 = vpop.f32.mrb[0].mxu0
        %v1283 = vpop.f32.mrb[0].mxu0
        %v1284 = vadd.f32 0.0, %v1283
        %v1285 = vpop.f32.mrb[0].mxu0
        %1286 = vmatprep.mubr.bf16.mxu0 0
        %1287 = vmatmul.mubr.bf16.gmra.mrb[0].mxu0 %v1211
        %v1288 = vpop.f32.mrb[0].mxu0
        %v1289 = vadd.f32 0.0, %v1288
        %v1290 = vpop.f32.mrb[0].mxu0
        %v1291 = vpop.f32.mrb[0].mxu0
        %v1292 = vadd.f32 0.0, %v1291
        %v1293 = vpop.f32.mrb[0].mxu0
        %1294 = vmatprep.mubr.bf16.mxu0 0
        %1295 = vmatmul.mubr.bf16.gmra.mrb[0].mxu0 %v1214
        %v1296 = vpop.f32.mrb[0].mxu0
        %v1297 = vadd.f32 0.0, %v1296
        %v1298 = vpop.f32.mrb[0].mxu0
        %v1299 = vpop.f32.mrb[0].mxu0
        %v1300 = vadd.f32 0.0, %v1299
        %v1301 = vpop.f32.mrb[0].mxu0
        %1302 = vmatprep.mubr.bf16.mxu0 0
        %1303 = vmatmul.mubr.bf16.gmra.mrb[0].mxu0 %v1217
        %v1304 = vpop.f32.mrb[0].mxu0
        %v1305 = vadd.f32 0.0, %v1304
        %v1306 = vpop.f32.mrb[0].mxu0
        %v1307 = vpop.f32.mrb[0].mxu0
        %v1308 = vadd.f32 0.0, %v1307
        %v1309 = vpop.f32.mrb[0].mxu0
        %1310 = vmatprep.mubr.bf16.mxu0 0
        %1311 = vmatmul.mubr.bf16.gmra.mrb[0].mxu0 %v1220
        %v1312 = vpop.f32.mrb[0].mxu0
        %v1313 = vadd.f32 0.0, %v1312
        %v1314 = vpop.f32.mrb[0].mxu0
        %v1315 = vpop.f32.mrb[0].mxu0
        %v1316 = vadd.f32 0.0, %v1315
        %v1317 = vpop.f32.mrb[0].mxu0
        %1318 = vdwg.mxu0
        %v1319 = vld [vmem:[#allocation2] sm:$0xff]
        %v1320 = vld [vmem:[#allocation2 + $0x8] sm:$0xff]
        %v1321 = vld [vmem:[#allocation2 + $0x10] sm:$0xff]
        %v1322 = vld [vmem:[#allocation2 + $0x18] sm:$0xff]
        %v1323 = vld [vmem:[#allocation2 + $0x20] sm:$0xff]
        %v1324 = vld [vmem:[#allocation2 + $0x28] sm:$0xff]
        %v1325 = vld [vmem:[#allocation2 + $0x30] sm:$0xff]
        %v1326 = vld [vmem:[#allocation2 + $0x38] sm:$0xff]
        %v1327 = vld [vmem:[#allocation2 + $0x40] sm:$0xff]
        %v1328 = vld [vmem:[#allocation2 + $0x48] sm:$0xff]
        %v1329 = vld [vmem:[#allocation2 + $0x50] sm:$0xff]
        %v1330 = vld [vmem:[#allocation2 + $0x58] sm:$0xff]
        %v1331 = vld [vmem:[#allocation2 + $0x60] sm:$0xff]
        %v1332 = vld [vmem:[#allocation2 + $0x68] sm:$0xff]
        %v1333 = vld [vmem:[#allocation2 + $0x70] sm:$0xff]
        %v1334 = vld [vmem:[#allocation2 + $0x78] sm:$0xff]
        %v1335 = vadd.f32 %v1319, %v1257
        %v1336 = vadd.f32 %v1320, %v1260
        %v1337 = vadd.f32 %v1321, %v1265
        %v1338 = vadd.f32 %v1322, %v1268
        %v1339 = vadd.f32 %v1323, %v1273
        %v1340 = vadd.f32 %v1324, %v1276
        %v1341 = vadd.f32 %v1325, %v1281
        %v1342 = vadd.f32 %v1326, %v1284
        %v1343 = vadd.f32 %v1327, %v1289
        %v1344 = vadd.f32 %v1328, %v1292
        %v1345 = vadd.f32 %v1329, %v1297
        %v1346 = vadd.f32 %v1330, %v1300
        %v1347 = vadd.f32 %v1331, %v1305
        %v1348 = vadd.f32 %v1332, %v1308
        %v1349 = vadd.f32 %v1333, %v1313
        %v1350 = vadd.f32 %v1334, %v1316
        %1351 = vst [vmem:[#allocation2] sm:$0xff] %v1335
        %1352 = vst [vmem:[#allocation2 + $0x8] sm:$0xff] %v1336
        %1353 = vst [vmem:[#allocation2 + $0x10] sm:$0xff] %v1337
        %1354 = vst [vmem:[#allocation2 + $0x18] sm:$0xff] %v1338
        %1355 = vst [vmem:[#allocation2 + $0x20] sm:$0xff] %v1339
        %1356 = vst [vmem:[#allocation2 + $0x28] sm:$0xff] %v1340
        %1357 = vst [vmem:[#allocation2 + $0x30] sm:$0xff] %v1341
        %1358 = vst [vmem:[#allocation2 + $0x38] sm:$0xff] %v1342
        %1359 = vst [vmem:[#allocation2 + $0x40] sm:$0xff] %v1343
        %1360 = vst [vmem:[#allocation2 + $0x48] sm:$0xff] %v1344
        %1361 = vst [vmem:[#allocation2 + $0x50] sm:$0xff] %v1345
        %1362 = vst [vmem:[#allocation2 + $0x58] sm:$0xff] %v1346
        %1363 = vst [vmem:[#allocation2 + $0x60] sm:$0xff] %v1347
        %1364 = vst [vmem:[#allocation2 + $0x68] sm:$0xff] %v1348
        %1365 = vst [vmem:[#allocation2 + $0x70] sm:$0xff] %v1349
        %1366 = vst [vmem:[#allocation2 + $0x78] sm:$0xff] %v1350
        %s1367 = scalar_lea.vmem %s356, 144
        %v1368 = vld [vmem:[%s1367] sm:$0xf]
        %v1369 = vld [vmem:[%s1367 + $0x4] sm:$0xf]
        %v1370 = vld [vmem:[%s1367 + $0x8] sm:$0xf]
        %v1371 = vld [vmem:[%s1367 + $0xc] sm:$0xf]
        %v1372 = vld [vmem:[%s1367 + $0x10] sm:$0xf]
        %v1373 = vld [vmem:[%s1367 + $0x14] sm:$0xf]
        %v1374 = vld [vmem:[%s1367 + $0x18] sm:$0xf]
        %v1375 = vld [vmem:[%s1367 + $0x1c] sm:$0xf]
        %v1376 = vld [vmem:[%s1367 + $0x20] sm:$0xf]
        %v1377 = vld [vmem:[%s1367 + $0x24] sm:$0xf]
        %v1378 = vld [vmem:[%s1367 + $0x28] sm:$0xf]
        %v1379 = vld [vmem:[%s1367 + $0x2c] sm:$0xf]
        %v1382 = vunpack.c.l.b16 %v389
        %v1383 = vunpack.c.l.b16 %v390
        %v1384 = vpack.c.b16 %v1383, %v1382
        %v1397 = vunpack.c.l.b16 %v1368
        %v1398 = vunpack.c.l.b16 %v1369
        %v1399 = vunpack.c.l.b16 %v1370
        %v1400 = vunpack.c.l.b16 %v1371
        %v1401 = vunpack.c.l.b16 %v1372
        %v1402 = vunpack.c.l.b16 %v1373
        %v1403 = vunpack.c.l.b16 %v1374
        %v1404 = vunpack.c.l.b16 %v1375
        %v1405 = vunpack.c.l.b16 %v1376
        %v1406 = vunpack.c.l.b16 %v1377
        %v1407 = vunpack.c.l.b16 %v1378
        %v1408 = vunpack.c.l.b16 %v1379
        %v1409 = vpack.c.b16 %v1398, %v1397
        %v1410 = vpack.c.b16 %v1400, %v1399
        %v1411 = vpack.c.b16 %v1402, %v1401
        %v1412 = vpack.c.b16 %v1404, %v1403
        %v1413 = vpack.c.b16 %v1406, %v1405
        %v1414 = vpack.c.b16 %v1408, %v1407
        %v1422 = vsel %vm483, %v1384, 0
        %1424 = vmatprep.subr.bf16.mxu0 0
        %1425 = vmatpush1.bf16.msra.mxu0 %v1409
        %1426 = vmatprep.subr.bf16.mxu0 0
        %1427 = vmatpush1.bf16.msra.mxu0 %v1410
        %1428 = vmatprep.subr.bf16.mxu0 0
        %1429 = vmatpush1.bf16.msra.mxu0 %v1411
        %1430 = vmatprep.subr.bf16.mxu0 0
        %1431 = vmatpush1.bf16.msra.mxu0 %v1412
        %1432 = vmatprep.subr.bf16.mxu0 0
        %1433 = vmatpush1.bf16.msra.mxu0 %v1413
        %1434 = vmatprep.subr.bf16.mxu0 0
        %1435 = vmatpush1.bf16.msra.mxu0 %v1414
        %1436 = vmatprep.subr.bf16.mxu0 0
        %1437 = vmatpush1.bf16.msra.mxu0 0
        %1438 = vmatprep.subr.bf16.mxu0 0
        %1439 = vmatpush1.bf16.msra.mxu0 0
        %1440 = vmatprep.subr.bf16.mxu0 0
        %1441 = vmatpush1.bf16.msra.mxu0 0
        %1442 = vmatprep.subr.bf16.mxu0 0
        %1443 = vmatpush1.bf16.msra.mxu0 0
        %1444 = vmatprep.subr.bf16.mxu0 0
        %1445 = vmatpush1.bf16.msra.mxu0 0
        %1446 = vmatprep.subr.bf16.mxu0 0
        %1447 = vmatpush1.bf16.msra.mxu0 0
        %1448 = vmatprep.subr.bf16.mxu0 0
        %1449 = vmatpush1.bf16.msra.mxu0 0
        %1450 = vmatprep.subr.bf16.mxu0 0
        %1451 = vmatpush1.bf16.msra.mxu0 0
        %1452 = vmatprep.subr.bf16.mxu0 0
        %1453 = vmatpush1.bf16.msra.mxu0 0
        %1454 = vmatprep.subr.bf16.mxu0 0
        %1455 = vmatpush1.bf16.msra.mxu0 0
        %1456 = vmatprep.mubr.bf16.mxu0 0
        %1457 = vmatmul.mubr.bf16.gmra.mrb[0].mxu0 %v488
        %v1458 = vpop.f32.mrb[0].mxu0
        %v1459 = vadd.f32 0.0, %v1458
        %v1460 = vpop.f32.mrb[0].mxu0
        %v1461 = vpop.f32.mrb[0].mxu0
        %v1462 = vadd.f32 0.0, %v1461
        %v1463 = vpop.f32.mrb[0].mxu0
        %1464 = vmatprep.mubr.bf16.mxu0 0
        %1465 = vmatmul.mubr.bf16.gmra.mrb[0].mxu0 %v491
        %v1466 = vpop.f32.mrb[0].mxu0
        %v1467 = vadd.f32 0.0, %v1466
        %v1468 = vpop.f32.mrb[0].mxu0
        %v1469 = vpop.f32.mrb[0].mxu0
        %v1470 = vadd.f32 0.0, %v1469
        %v1471 = vpop.f32.mrb[0].mxu0
        %1472 = vmatprep.mubr.bf16.mxu0 0
        %1473 = vmatmul.mubr.bf16.gmra.mrb[0].mxu0 %v494
        %v1474 = vpop.f32.mrb[0].mxu0
        %v1475 = vadd.f32 0.0, %v1474
        %v1476 = vpop.f32.mrb[0].mxu0
        %v1477 = vpop.f32.mrb[0].mxu0
        %v1478 = vadd.f32 0.0, %v1477
        %v1479 = vpop.f32.mrb[0].mxu0
        %1480 = vmatprep.mubr.bf16.mxu0 0
        %1481 = vmatmul.mubr.bf16.gmra.mrb[0].mxu0 %v497
        %v1482 = vpop.f32.mrb[0].mxu0
        %v1483 = vadd.f32 0.0, %v1482
        %v1484 = vpop.f32.mrb[0].mxu0
        %v1485 = vpop.f32.mrb[0].mxu0
        %v1486 = vadd.f32 0.0, %v1485
        %v1487 = vpop.f32.mrb[0].mxu0
        %1488 = vmatprep.mubr.bf16.mxu0 0
        %1489 = vmatmul.mubr.bf16.gmra.mrb[0].mxu0 %v500
        %v1490 = vpop.f32.mrb[0].mxu0
        %v1491 = vadd.f32 0.0, %v1490
        %v1492 = vpop.f32.mrb[0].mxu0
        %v1493 = vpop.f32.mrb[0].mxu0
        %v1494 = vadd.f32 0.0, %v1493
        %v1495 = vpop.f32.mrb[0].mxu0
        %1496 = vmatprep.mubr.bf16.mxu0 0
        %1497 = vmatmul.mubr.bf16.gmra.mrb[0].mxu0 %v503
        %v1498 = vpop.f32.mrb[0].mxu0
        %v1499 = vadd.f32 0.0, %v1498
        %v1500 = vpop.f32.mrb[0].mxu0
        %v1501 = vpop.f32.mrb[0].mxu0
        %v1502 = vadd.f32 0.0, %v1501
        %v1503 = vpop.f32.mrb[0].mxu0
        %1504 = vmatprep.mubr.bf16.mxu0 0
        %1505 = vmatmul.mubr.bf16.gmra.mrb[0].mxu0 %v506
        %v1506 = vpop.f32.mrb[0].mxu0
        %v1507 = vadd.f32 0.0, %v1506
        %v1508 = vpop.f32.mrb[0].mxu0
        %v1509 = vpop.f32.mrb[0].mxu0
        %v1510 = vadd.f32 0.0, %v1509
        %v1511 = vpop.f32.mrb[0].mxu0
        %1512 = vmatprep.mubr.bf16.mxu0 0
        %1513 = vmatmul.mubr.bf16.gmra.mrb[0].mxu0 %v1422
        %v1514 = vpop.f32.mrb[0].mxu0
        %v1515 = vadd.f32 0.0, %v1514
        %v1516 = vpop.f32.mrb[0].mxu0
        %v1517 = vpop.f32.mrb[0].mxu0
        %v1518 = vadd.f32 0.0, %v1517
        %v1519 = vpop.f32.mrb[0].mxu0
        %1520 = vdwg.mxu0
        %v1521 = vld [vmem:[#allocation2] sm:$0xff]
        %v1522 = vld [vmem:[#allocation2 + $0x8] sm:$0xff]
        %v1523 = vld [vmem:[#allocation2 + $0x10] sm:$0xff]
        %v1524 = vld [vmem:[#allocation2 + $0x18] sm:$0xff]
        %v1525 = vld [vmem:[#allocation2 + $0x20] sm:$0xff]
        %v1526 = vld [vmem:[#allocation2 + $0x28] sm:$0xff]
        %v1527 = vld [vmem:[#allocation2 + $0x30] sm:$0xff]
        %v1528 = vld [vmem:[#allocation2 + $0x38] sm:$0xff]
        %v1529 = vld [vmem:[#allocation2 + $0x40] sm:$0xff]
        %v1530 = vld [vmem:[#allocation2 + $0x48] sm:$0xff]
        %v1531 = vld [vmem:[#allocation2 + $0x50] sm:$0xff]
        %v1532 = vld [vmem:[#allocation2 + $0x58] sm:$0xff]
        %v1533 = vld [vmem:[#allocation2 + $0x60] sm:$0xff]
        %v1534 = vld [vmem:[#allocation2 + $0x68] sm:$0xff]
        %v1535 = vld [vmem:[#allocation2 + $0x70] sm:$0xff]
        %v1536 = vld [vmem:[#allocation2 + $0x78] sm:$0xff]
        %v1537 = vadd.f32 %v1521, %v1459
        %v1538 = vadd.f32 %v1522, %v1462
        %v1539 = vadd.f32 %v1523, %v1467
        %v1540 = vadd.f32 %v1524, %v1470
        %v1541 = vadd.f32 %v1525, %v1475
        %v1542 = vadd.f32 %v1526, %v1478
        %v1543 = vadd.f32 %v1527, %v1483
        %v1544 = vadd.f32 %v1528, %v1486
        %v1545 = vadd.f32 %v1529, %v1491
        %v1546 = vadd.f32 %v1530, %v1494
        %v1547 = vadd.f32 %v1531, %v1499
        %v1548 = vadd.f32 %v1532, %v1502
        %v1549 = vadd.f32 %v1533, %v1507
        %v1550 = vadd.f32 %v1534, %v1510
        %v1551 = vadd.f32 %v1535, %v1515
        %v1552 = vadd.f32 %v1536, %v1518
        %1553 = vst [vmem:[#allocation2] sm:$0xff] %v1537
        %1554 = vst [vmem:[#allocation2 + $0x8] sm:$0xff] %v1538
        %1555 = vst [vmem:[#allocation2 + $0x10] sm:$0xff] %v1539
        %1556 = vst [vmem:[#allocation2 + $0x18] sm:$0xff] %v1540
        %1557 = vst [vmem:[#allocation2 + $0x20] sm:$0xff] %v1541
        %1558 = vst [vmem:[#allocation2 + $0x28] sm:$0xff] %v1542
        %1559 = vst [vmem:[#allocation2 + $0x30] sm:$0xff] %v1543
        %1560 = vst [vmem:[#allocation2 + $0x38] sm:$0xff] %v1544
        %1561 = vst [vmem:[#allocation2 + $0x40] sm:$0xff] %v1545
        %1562 = vst [vmem:[#allocation2 + $0x48] sm:$0xff] %v1546
        %1563 = vst [vmem:[#allocation2 + $0x50] sm:$0xff] %v1547
        %1564 = vst [vmem:[#allocation2 + $0x58] sm:$0xff] %v1548
        %1565 = vst [vmem:[#allocation2 + $0x60] sm:$0xff] %v1549
        %1566 = vst [vmem:[#allocation2 + $0x68] sm:$0xff] %v1550
        %1567 = vst [vmem:[#allocation2 + $0x70] sm:$0xff] %v1551
        %1568 = vst [vmem:[#allocation2 + $0x78] sm:$0xff] %v1552
        %v1570 = vshrl.u32 %v389, 16
        %v1572 = vrot.slane %v1570, 4
        %v1573 = vshll.u32 %v389, 16
        %v1575 = vrot.slane %v1573, 5
        %v1576 = vor.u32 %v1572, %v1575
        %v1577 = vrot.slane %v1576, 4
        %v1579 = vshll.u32 %v390, 16
        %v1581 = vrot.slane %v1579, 5
        %v1582 = vsel %vm623, %v1577, %v1581
        %v1583 = vshrl.u32 %v390, 16
        %v1585 = vrot.slane %v1583, 4
        %v1586 = vor.u32 %v1585, %v1581
        %v1587 = vrot.slane %v1586, 4
        %v1589 = vshll.u32 %v391, 16
        %v1591 = vrot.slane %v1589, 5
        %v1592 = vsel %vm623, %v1587, %v1591
        %s1593 = scalar_lea.vmem %s356, 192
        %v1594 = vld [vmem:[%s1593] sm:$0xf]
        %v1595 = vld [vmem:[%s1593 + $0x4] sm:$0xf]
        %v1596 = vld [vmem:[%s1593 + $0x8] sm:$0xf]
        %v1597 = vld [vmem:[%s1593 + $0xc] sm:$0xf]
        %v1598 = vld [vmem:[%s1593 + $0x10] sm:$0xf]
        %v1599 = vld [vmem:[%s1593 + $0x14] sm:$0xf]
        %v1600 = vld [vmem:[%s1593 + $0x18] sm:$0xf]
        %v1601 = vld [vmem:[%s1593 + $0x1c] sm:$0xf]
        %v1602 = vld [vmem:[%s1593 + $0x20] sm:$0xf]
        %v1603 = vld [vmem:[%s1593 + $0x24] sm:$0xf]
        %v1604 = vld [vmem:[%s1593 + $0x28] sm:$0xf]
        %v1605 = vld [vmem:[%s1593 + $0x2c] sm:$0xf]
        %v1606 = vunpack.c.l.b16 %v1582
        %v1607 = vunpack.c.l.b16 %v1592
        %v1608 = vpack.c.b16 %v1607, %v1606
        %v1621 = vunpack.c.l.b16 %v1594
        %v1622 = vunpack.c.l.b16 %v1595
        %v1623 = vunpack.c.l.b16 %v1596
        %v1624 = vunpack.c.l.b16 %v1597
        %v1625 = vunpack.c.l.b16 %v1598
        %v1626 = vunpack.c.l.b16 %v1599
        %v1627 = vunpack.c.l.b16 %v1600
        %v1628 = vunpack.c.l.b16 %v1601
        %v1629 = vunpack.c.l.b16 %v1602
        %v1630 = vunpack.c.l.b16 %v1603
        %v1631 = vunpack.c.l.b16 %v1604
        %v1632 = vunpack.c.l.b16 %v1605
        %v1633 = vpack.c.b16 %v1622, %v1621
        %v1634 = vpack.c.b16 %v1624, %v1623
        %v1635 = vpack.c.b16 %v1626, %v1625
        %v1636 = vpack.c.b16 %v1628, %v1627
        %v1637 = vpack.c.b16 %v1630, %v1629
        %v1638 = vpack.c.b16 %v1632, %v1631
        %v1646 = vsel %vm483, %v1608, 0
        %1648 = vmatprep.subr.bf16.mxu0 0
        %1649 = vmatpush1.bf16.msra.mxu0 %v1633
        %1650 = vmatprep.subr.bf16.mxu0 0
        %1651 = vmatpush1.bf16.msra.mxu0 %v1634
        %1652 = vmatprep.subr.bf16.mxu0 0
        %1653 = vmatpush1.bf16.msra.mxu0 %v1635
        %1654 = vmatprep.subr.bf16.mxu0 0
        %1655 = vmatpush1.bf16.msra.mxu0 %v1636
        %1656 = vmatprep.subr.bf16.mxu0 0
        %1657 = vmatpush1.bf16.msra.mxu0 %v1637
        %1658 = vmatprep.subr.bf16.mxu0 0
        %1659 = vmatpush1.bf16.msra.mxu0 %v1638
        %1660 = vmatprep.subr.bf16.mxu0 0
        %1661 = vmatpush1.bf16.msra.mxu0 0
        %1662 = vmatprep.subr.bf16.mxu0 0
        %1663 = vmatpush1.bf16.msra.mxu0 0
        %1664 = vmatprep.subr.bf16.mxu0 0
        %1665 = vmatpush1.bf16.msra.mxu0 0
        %1666 = vmatprep.subr.bf16.mxu0 0
        %1667 = vmatpush1.bf16.msra.mxu0 0
        %1668 = vmatprep.subr.bf16.mxu0 0
        %1669 = vmatpush1.bf16.msra.mxu0 0
        %1670 = vmatprep.subr.bf16.mxu0 0
        %1671 = vmatpush1.bf16.msra.mxu0 0
        %1672 = vmatprep.subr.bf16.mxu0 0
        %1673 = vmatpush1.bf16.msra.mxu0 0
        %1674 = vmatprep.subr.bf16.mxu0 0
        %1675 = vmatpush1.bf16.msra.mxu0 0
        %1676 = vmatprep.subr.bf16.mxu0 0
        %1677 = vmatpush1.bf16.msra.mxu0 0
        %1678 = vmatprep.subr.bf16.mxu0 0
        %1679 = vmatpush1.bf16.msra.mxu0 0
        %1680 = vmatprep.mubr.bf16.mxu0 0
        %1681 = vmatmul.mubr.bf16.gmra.mrb[0].mxu0 %v893
        %v1682 = vpop.f32.mrb[0].mxu0
        %v1683 = vadd.f32 0.0, %v1682
        %v1684 = vpop.f32.mrb[0].mxu0
        %v1685 = vpop.f32.mrb[0].mxu0
        %v1686 = vadd.f32 0.0, %v1685
        %v1687 = vpop.f32.mrb[0].mxu0
        %1688 = vmatprep.mubr.bf16.mxu0 0
        %1689 = vmatmul.mubr.bf16.gmra.mrb[0].mxu0 %v896
        %v1690 = vpop.f32.mrb[0].mxu0
        %v1691 = vadd.f32 0.0, %v1690
        %v1692 = vpop.f32.mrb[0].mxu0
        %v1693 = vpop.f32.mrb[0].mxu0
        %v1694 = vadd.f32 0.0, %v1693
        %v1695 = vpop.f32.mrb[0].mxu0
        %1696 = vmatprep.mubr.bf16.mxu0 0
        %1697 = vmatmul.mubr.bf16.gmra.mrb[0].mxu0 %v899
        %v1698 = vpop.f32.mrb[0].mxu0
        %v1699 = vadd.f32 0.0, %v1698
        %v1700 = vpop.f32.mrb[0].mxu0
        %v1701 = vpop.f32.mrb[0].mxu0
        %v1702 = vadd.f32 0.0, %v1701
        %v1703 = vpop.f32.mrb[0].mxu0
        %1704 = vmatprep.mubr.bf16.mxu0 0
        %1705 = vmatmul.mubr.bf16.gmra.mrb[0].mxu0 %v902
        %v1706 = vpop.f32.mrb[0].mxu0
        %v1707 = vadd.f32 0.0, %v1706
        %v1708 = vpop.f32.mrb[0].mxu0
        %v1709 = vpop.f32.mrb[0].mxu0
        %v1710 = vadd.f32 0.0, %v1709
        %v1711 = vpop.f32.mrb[0].mxu0
        %1712 = vmatprep.mubr.bf16.mxu0 0
        %1713 = vmatmul.mubr.bf16.gmra.mrb[0].mxu0 %v905
        %v1714 = vpop.f32.mrb[0].mxu0
        %v1715 = vadd.f32 0.0, %v1714
        %v1716 = vpop.f32.mrb[0].mxu0
        %v1717 = vpop.f32.mrb[0].mxu0
        %v1718 = vadd.f32 0.0, %v1717
        %v1719 = vpop.f32.mrb[0].mxu0
        %1720 = vmatprep.mubr.bf16.mxu0 0
        %1721 = vmatmul.mubr.bf16.gmra.mrb[0].mxu0 %v908
        %v1722 = vpop.f32.mrb[0].mxu0
        %v1723 = vadd.f32 0.0, %v1722
        %v1724 = vpop.f32.mrb[0].mxu0
        %v1725 = vpop.f32.mrb[0].mxu0
        %v1726 = vadd.f32 0.0, %v1725
        %v1727 = vpop.f32.mrb[0].mxu0
        %1728 = vmatprep.mubr.bf16.mxu0 0
        %1729 = vmatmul.mubr.bf16.gmra.mrb[0].mxu0 %v911
        %v1730 = vpop.f32.mrb[0].mxu0
        %v1731 = vadd.f32 0.0, %v1730
        %v1732 = vpop.f32.mrb[0].mxu0
        %v1733 = vpop.f32.mrb[0].mxu0
        %v1734 = vadd.f32 0.0, %v1733
        %v1735 = vpop.f32.mrb[0].mxu0
        %1736 = vmatprep.mubr.bf16.mxu0 0
        %1737 = vmatmul.mubr.bf16.gmra.mrb[0].mxu0 %v1646
        %v1738 = vpop.f32.mrb[0].mxu0
        %v1739 = vadd.f32 0.0, %v1738
        %v1740 = vpop.f32.mrb[0].mxu0
        %v1741 = vpop.f32.mrb[0].mxu0
        %v1742 = vadd.f32 0.0, %v1741
        %v1743 = vpop.f32.mrb[0].mxu0
        %1744 = vdwg.mxu0
        %v1745 = vld [vmem:[#allocation2] sm:$0xff]
        %v1746 = vld [vmem:[#allocation2 + $0x8] sm:$0xff]
        %v1747 = vld [vmem:[#allocation2 + $0x10] sm:$0xff]
        %v1748 = vld [vmem:[#allocation2 + $0x18] sm:$0xff]
        %v1749 = vld [vmem:[#allocation2 + $0x20] sm:$0xff]
        %v1750 = vld [vmem:[#allocation2 + $0x28] sm:$0xff]
        %v1751 = vld [vmem:[#allocation2 + $0x30] sm:$0xff]
        %v1752 = vld [vmem:[#allocation2 + $0x38] sm:$0xff]
        %v1753 = vld [vmem:[#allocation2 + $0x40] sm:$0xff]
        %v1754 = vld [vmem:[#allocation2 + $0x48] sm:$0xff]
        %v1755 = vld [vmem:[#allocation2 + $0x50] sm:$0xff]
        %v1756 = vld [vmem:[#allocation2 + $0x58] sm:$0xff]
        %v1757 = vld [vmem:[#allocation2 + $0x60] sm:$0xff]
        %v1758 = vld [vmem:[#allocation2 + $0x68] sm:$0xff]
        %v1759 = vld [vmem:[#allocation2 + $0x70] sm:$0xff]
        %v1760 = vld [vmem:[#allocation2 + $0x78] sm:$0xff]
        %v1761 = vadd.f32 %v1745, %v1683
        %v1762 = vadd.f32 %v1746, %v1686
        %v1763 = vadd.f32 %v1747, %v1691
        %v1764 = vadd.f32 %v1748, %v1694
        %v1765 = vadd.f32 %v1749, %v1699
        %v1766 = vadd.f32 %v1750, %v1702
        %v1767 = vadd.f32 %v1751, %v1707
        %v1768 = vadd.f32 %v1752, %v1710
        %v1769 = vadd.f32 %v1753, %v1715
        %v1770 = vadd.f32 %v1754, %v1718
        %v1771 = vadd.f32 %v1755, %v1723
        %v1772 = vadd.f32 %v1756, %v1726
        %v1773 = vadd.f32 %v1757, %v1731
        %v1774 = vadd.f32 %v1758, %v1734
        %v1775 = vadd.f32 %v1759, %v1739
        %v1776 = vadd.f32 %v1760, %v1742
        %1777 = vst [vmem:[#allocation2] sm:$0xff] %v1761
        %1778 = vst [vmem:[#allocation2 + $0x8] sm:$0xff] %v1762
        %1779 = vst [vmem:[#allocation2 + $0x10] sm:$0xff] %v1763
        %1780 = vst [vmem:[#allocation2 + $0x18] sm:$0xff] %v1764
        %1781 = vst [vmem:[#allocation2 + $0x20] sm:$0xff] %v1765
        %1782 = vst [vmem:[#allocation2 + $0x28] sm:$0xff] %v1766
        %1783 = vst [vmem:[#allocation2 + $0x30] sm:$0xff] %v1767
        %1784 = vst [vmem:[#allocation2 + $0x38] sm:$0xff] %v1768
        %1785 = vst [vmem:[#allocation2 + $0x40] sm:$0xff] %v1769
        %1786 = vst [vmem:[#allocation2 + $0x48] sm:$0xff] %v1770
        %1787 = vst [vmem:[#allocation2 + $0x50] sm:$0xff] %v1771
        %1788 = vst [vmem:[#allocation2 + $0x58] sm:$0xff] %v1772
        %1789 = vst [vmem:[#allocation2 + $0x60] sm:$0xff] %v1773
        %1790 = vst [vmem:[#allocation2 + $0x68] sm:$0xff] %v1774
        %1791 = vst [vmem:[#allocation2 + $0x70] sm:$0xff] %v1775
        %1792 = vst [vmem:[#allocation2 + $0x78] sm:$0xff] %v1776
        %v1794 = vrot.slane %v389, 5
        %v1795 = vrot.slane %v1794, 4
        %v1796 = vrot.slane %v390, 5
        %v1797 = vsel %vm1068, %v1795, %v1796
        %v1798 = vrot.slane %v1796, 4
        %v1799 = vrot.slane %v391, 5
        %v1800 = vsel %vm1068, %v1798, %v1799
        %s1801 = scalar_lea.vmem %s356, 240
        %v1802 = vld [vmem:[%s1801] sm:$0xf]
        %v1803 = vld [vmem:[%s1801 + $0x4] sm:$0xf]
        %v1804 = vld [vmem:[%s1801 + $0x8] sm:$0xf]
        %v1805 = vld [vmem:[%s1801 + $0xc] sm:$0xf]
        %v1806 = vld [vmem:[%s1801 + $0x10] sm:$0xf]
        %v1807 = vld [vmem:[%s1801 + $0x14] sm:$0xf]
        %v1808 = vld [vmem:[%s1801 + $0x18] sm:$0xf]
        %v1809 = vld [vmem:[%s1801 + $0x1c] sm:$0xf]
        %v1810 = vld [vmem:[%s1801 + $0x20] sm:$0xf]
        %v1811 = vld [vmem:[%s1801 + $0x24] sm:$0xf]
        %v1812 = vld [vmem:[%s1801 + $0x28] sm:$0xf]
        %v1813 = vld [vmem:[%s1801 + $0x2c] sm:$0xf]
        %v1814 = vunpack.c.l.b16 %v1797
        %v1815 = vunpack.c.l.b16 %v1800
        %v1816 = vpack.c.b16 %v1815, %v1814
        %v1829 = vunpack.c.l.b16 %v1802
        %v1830 = vunpack.c.l.b16 %v1803
        %v1831 = vunpack.c.l.b16 %v1804
        %v1832 = vunpack.c.l.b16 %v1805
        %v1833 = vunpack.c.l.b16 %v1806
        %v1834 = vunpack.c.l.b16 %v1807
        %v1835 = vunpack.c.l.b16 %v1808
        %v1836 = vunpack.c.l.b16 %v1809
        %v1837 = vunpack.c.l.b16 %v1810
        %v1838 = vunpack.c.l.b16 %v1811
        %v1839 = vunpack.c.l.b16 %v1812
        %v1840 = vunpack.c.l.b16 %v1813
        %v1841 = vpack.c.b16 %v1830, %v1829
        %v1842 = vpack.c.b16 %v1832, %v1831
        %v1843 = vpack.c.b16 %v1834, %v1833
        %v1844 = vpack.c.b16 %v1836, %v1835
        %v1845 = vpack.c.b16 %v1838, %v1837
        %v1846 = vpack.c.b16 %v1840, %v1839
        %v1854 = vsel %vm483, %v1816, 0
        %1856 = vmatprep.subr.bf16.mxu0 0
        %1857 = vmatpush1.bf16.msra.mxu0 %v1841
        %1858 = vmatprep.subr.bf16.mxu0 0
        %1859 = vmatpush1.bf16.msra.mxu0 %v1842
        %1860 = vmatprep.subr.bf16.mxu0 0
        %1861 = vmatpush1.bf16.msra.mxu0 %v1843
        %1862 = vmatprep.subr.bf16.mxu0 0
        %1863 = vmatpush1.bf16.msra.mxu0 %v1844
        %1864 = vmatprep.subr.bf16.mxu0 0
        %1865 = vmatpush1.bf16.msra.mxu0 %v1845
        %1866 = vmatprep.subr.bf16.mxu0 0
        %1867 = vmatpush1.bf16.msra.mxu0 %v1846
        %1868 = vmatprep.subr.bf16.mxu0 0
        %1869 = vmatpush1.bf16.msra.mxu0 0
        %1870 = vmatprep.subr.bf16.mxu0 0
        %1871 = vmatpush1.bf16.msra.mxu0 0
        %1872 = vmatprep.subr.bf16.mxu0 0
        %1873 = vmatpush1.bf16.msra.mxu0 0
        %1874 = vmatprep.subr.bf16.mxu0 0
        %1875 = vmatpush1.bf16.msra.mxu0 0
        %1876 = vmatprep.subr.bf16.mxu0 0
        %1877 = vmatpush1.bf16.msra.mxu0 0
        %1878 = vmatprep.subr.bf16.mxu0 0
        %1879 = vmatpush1.bf16.msra.mxu0 0
        %1880 = vmatprep.subr.bf16.mxu0 0
        %1881 = vmatpush1.bf16.msra.mxu0 0
        %1882 = vmatprep.subr.bf16.mxu0 0
        %1883 = vmatpush1.bf16.msra.mxu0 0
        %1884 = vmatprep.subr.bf16.mxu0 0
        %1885 = vmatpush1.bf16.msra.mxu0 0
        %1886 = vmatprep.subr.bf16.mxu0 0
        %1887 = vmatpush1.bf16.msra.mxu0 0
        %1888 = vmatprep.mubr.bf16.mxu0 0
        %1889 = vmatmul.mubr.bf16.gmra.mrb[0].mxu0 %v1202
        %v1890 = vpop.f32.mrb[0].mxu0
        %v1891 = vadd.f32 0.0, %v1890
        %v1892 = vpop.f32.mrb[0].mxu0
        %v1893 = vpop.f32.mrb[0].mxu0
        %v1894 = vadd.f32 0.0, %v1893
        %v1895 = vpop.f32.mrb[0].mxu0
        %1896 = vmatprep.mubr.bf16.mxu0 0
        %1897 = vmatmul.mubr.bf16.gmra.mrb[0].mxu0 %v1205
        %v1898 = vpop.f32.mrb[0].mxu0
        %v1899 = vadd.f32 0.0, %v1898
        %v1900 = vpop.f32.mrb[0].mxu0
        %v1901 = vpop.f32.mrb[0].mxu0
        %v1902 = vadd.f32 0.0, %v1901
        %v1903 = vpop.f32.mrb[0].mxu0
        %1904 = vmatprep.mubr.bf16.mxu0 0
        %1905 = vmatmul.mubr.bf16.gmra.mrb[0].mxu0 %v1208
        %v1906 = vpop.f32.mrb[0].mxu0
        %v1907 = vadd.f32 0.0, %v1906
        %v1908 = vpop.f32.mrb[0].mxu0
        %v1909 = vpop.f32.mrb[0].mxu0
        %v1910 = vadd.f32 0.0, %v1909
        %v1911 = vpop.f32.mrb[0].mxu0
        %1912 = vmatprep.mubr.bf16.mxu0 0
        %1913 = vmatmul.mubr.bf16.gmra.mrb[0].mxu0 %v1211
        %v1914 = vpop.f32.mrb[0].mxu0
        %v1915 = vadd.f32 0.0, %v1914
        %v1916 = vpop.f32.mrb[0].mxu0
        %v1917 = vpop.f32.mrb[0].mxu0
        %v1918 = vadd.f32 0.0, %v1917
        %v1919 = vpop.f32.mrb[0].mxu0
        %1920 = vmatprep.mubr.bf16.mxu0 0
        %1921 = vmatmul.mubr.bf16.gmra.mrb[0].mxu0 %v1214
        %v1922 = vpop.f32.mrb[0].mxu0
        %v1923 = vadd.f32 0.0, %v1922
        %v1924 = vpop.f32.mrb[0].mxu0
        %v1925 = vpop.f32.mrb[0].mxu0
        %v1926 = vadd.f32 0.0, %v1925
        %v1927 = vpop.f32.mrb[0].mxu0
        %1928 = vmatprep.mubr.bf16.mxu0 0
        %1929 = vmatmul.mubr.bf16.gmra.mrb[0].mxu0 %v1217
        %v1930 = vpop.f32.mrb[0].mxu0
        %v1931 = vadd.f32 0.0, %v1930
        %v1932 = vpop.f32.mrb[0].mxu0
        %v1933 = vpop.f32.mrb[0].mxu0
        %v1934 = vadd.f32 0.0, %v1933
        %v1935 = vpop.f32.mrb[0].mxu0
        %1936 = vmatprep.mubr.bf16.mxu0 0
        %1937 = vmatmul.mubr.bf16.gmra.mrb[0].mxu0 %v1220
        %v1938 = vpop.f32.mrb[0].mxu0
        %v1939 = vadd.f32 0.0, %v1938
        %v1940 = vpop.f32.mrb[0].mxu0
        %v1941 = vpop.f32.mrb[0].mxu0
        %v1942 = vadd.f32 0.0, %v1941
        %v1943 = vpop.f32.mrb[0].mxu0
        %1944 = vmatprep.mubr.bf16.mxu0 0
        %1945 = vmatmul.mubr.bf16.gmra.mrb[0].mxu0 %v1854
        %v1946 = vpop.f32.mrb[0].mxu0
        %v1947 = vadd.f32 0.0, %v1946
        %v1948 = vpop.f32.mrb[0].mxu0
        %v1949 = vpop.f32.mrb[0].mxu0
        %v1950 = vadd.f32 0.0, %v1949
        %v1951 = vpop.f32.mrb[0].mxu0
        %1952 = vdwg.mxu0
        %v1953 = vld [vmem:[#allocation2] sm:$0xff]
        %v1954 = vld [vmem:[#allocation2 + $0x8] sm:$0xff]
        %v1955 = vld [vmem:[#allocation2 + $0x10] sm:$0xff]
        %v1956 = vld [vmem:[#allocation2 + $0x18] sm:$0xff]
        %v1957 = vld [vmem:[#allocation2 + $0x20] sm:$0xff]
        %v1958 = vld [vmem:[#allocation2 + $0x28] sm:$0xff]
        %v1959 = vld [vmem:[#allocation2 + $0x30] sm:$0xff]
        %v1960 = vld [vmem:[#allocation2 + $0x38] sm:$0xff]
        %v1961 = vld [vmem:[#allocation2 + $0x40] sm:$0xff]
        %v1962 = vld [vmem:[#allocation2 + $0x48] sm:$0xff]
        %v1963 = vld [vmem:[#allocation2 + $0x50] sm:$0xff]
        %v1964 = vld [vmem:[#allocation2 + $0x58] sm:$0xff]
        %v1965 = vld [vmem:[#allocation2 + $0x60] sm:$0xff]
        %v1966 = vld [vmem:[#allocation2 + $0x68] sm:$0xff]
        %v1967 = vld [vmem:[#allocation2 + $0x70] sm:$0xff]
        %v1968 = vld [vmem:[#allocation2 + $0x78] sm:$0xff]
        %v1969 = vadd.f32 %v1953, %v1891
        %v1970 = vadd.f32 %v1954, %v1894
        %v1971 = vadd.f32 %v1955, %v1899
        %v1972 = vadd.f32 %v1956, %v1902
        %v1973 = vadd.f32 %v1957, %v1907
        %v1974 = vadd.f32 %v1958, %v1910
        %v1975 = vadd.f32 %v1959, %v1915
        %v1976 = vadd.f32 %v1960, %v1918
        %v1977 = vadd.f32 %v1961, %v1923
        %v1978 = vadd.f32 %v1962, %v1926
        %v1979 = vadd.f32 %v1963, %v1931
        %v1980 = vadd.f32 %v1964, %v1934
        %v1981 = vadd.f32 %v1965, %v1939
        %v1982 = vadd.f32 %v1966, %v1942
        %v1983 = vadd.f32 %v1967, %v1947
        %v1984 = vadd.f32 %v1968, %v1950
        %1985 = vst [vmem:[#allocation2] sm:$0xff] %v1969
        %1986 = vst [vmem:[#allocation2 + $0x8] sm:$0xff] %v1970
        %1987 = vst [vmem:[#allocation2 + $0x10] sm:$0xff] %v1971
        %1988 = vst [vmem:[#allocation2 + $0x18] sm:$0xff] %v1972
        %1989 = vst [vmem:[#allocation2 + $0x20] sm:$0xff] %v1973
        %1990 = vst [vmem:[#allocation2 + $0x28] sm:$0xff] %v1974
        %1991 = vst [vmem:[#allocation2 + $0x30] sm:$0xff] %v1975
        %1992 = vst [vmem:[#allocation2 + $0x38] sm:$0xff] %v1976
        %1993 = vst [vmem:[#allocation2 + $0x40] sm:$0xff] %v1977
        %1994 = vst [vmem:[#allocation2 + $0x48] sm:$0xff] %v1978
        %1995 = vst [vmem:[#allocation2 + $0x50] sm:$0xff] %v1979
        %1996 = vst [vmem:[#allocation2 + $0x58] sm:$0xff] %v1980
        %1997 = vst [vmem:[#allocation2 + $0x60] sm:$0xff] %v1981
        %1998 = vst [vmem:[#allocation2 + $0x68] sm:$0xff] %v1982
        %1999 = vst [vmem:[#allocation2 + $0x70] sm:$0xff] %v1983
        %2000 = vst [vmem:[#allocation2 + $0x78] sm:$0xff] %v1984
        %s2001 = scalar_lea.vmem %s356, 288
        %v2002 = vld [vmem:[%s2001] sm:$0xf]
        %v2003 = vld [vmem:[%s2001 + $0x4] sm:$0xf]
        %v2004 = vld [vmem:[%s2001 + $0x8] sm:$0xf]
        %v2005 = vld [vmem:[%s2001 + $0xc] sm:$0xf]
        %v2006 = vld [vmem:[%s2001 + $0x10] sm:$0xf]
        %v2007 = vld [vmem:[%s2001 + $0x14] sm:$0xf]
        %v2008 = vld [vmem:[%s2001 + $0x18] sm:$0xf]
        %v2009 = vld [vmem:[%s2001 + $0x1c] sm:$0xf]
        %v2010 = vld [vmem:[%s2001 + $0x20] sm:$0xf]
        %v2011 = vld [vmem:[%s2001 + $0x24] sm:$0xf]
        %v2012 = vld [vmem:[%s2001 + $0x28] sm:$0xf]
        %v2013 = vld [vmem:[%s2001 + $0x2c] sm:$0xf]
        %v2016 = vunpack.c.l.b16 %v392
        %v2017 = vunpack.c.l.b16 %v393
        %v2018 = vpack.c.b16 %v2017, %v2016
        %v2031 = vunpack.c.l.b16 %v2002
        %v2032 = vunpack.c.l.b16 %v2003
        %v2033 = vunpack.c.l.b16 %v2004
        %v2034 = vunpack.c.l.b16 %v2005
        %v2035 = vunpack.c.l.b16 %v2006
        %v2036 = vunpack.c.l.b16 %v2007
        %v2037 = vunpack.c.l.b16 %v2008
        %v2038 = vunpack.c.l.b16 %v2009
        %v2039 = vunpack.c.l.b16 %v2010
        %v2040 = vunpack.c.l.b16 %v2011
        %v2041 = vunpack.c.l.b16 %v2012
        %v2042 = vunpack.c.l.b16 %v2013
        %v2043 = vpack.c.b16 %v2032, %v2031
        %v2044 = vpack.c.b16 %v2034, %v2033
        %v2045 = vpack.c.b16 %v2036, %v2035
        %v2046 = vpack.c.b16 %v2038, %v2037
        %v2047 = vpack.c.b16 %v2040, %v2039
        %v2048 = vpack.c.b16 %v2042, %v2041
        %v2056 = vsel %vm483, %v2018, 0
        %2058 = vmatprep.subr.bf16.mxu0 0
        %2059 = vmatpush1.bf16.msra.mxu0 %v2043
        %2060 = vmatprep.subr.bf16.mxu0 0
        %2061 = vmatpush1.bf16.msra.mxu0 %v2044
        %2062 = vmatprep.subr.bf16.mxu0 0
        %2063 = vmatpush1.bf16.msra.mxu0 %v2045
        %2064 = vmatprep.subr.bf16.mxu0 0
        %2065 = vmatpush1.bf16.msra.mxu0 %v2046
        %2066 = vmatprep.subr.bf16.mxu0 0
        %2067 = vmatpush1.bf16.msra.mxu0 %v2047
        %2068 = vmatprep.subr.bf16.mxu0 0
        %2069 = vmatpush1.bf16.msra.mxu0 %v2048
        %2070 = vmatprep.subr.bf16.mxu0 0
        %2071 = vmatpush1.bf16.msra.mxu0 0
        %2072 = vmatprep.subr.bf16.mxu0 0
        %2073 = vmatpush1.bf16.msra.mxu0 0
        %2074 = vmatprep.subr.bf16.mxu0 0
        %2075 = vmatpush1.bf16.msra.mxu0 0
        %2076 = vmatprep.subr.bf16.mxu0 0
        %2077 = vmatpush1.bf16.msra.mxu0 0
        %2078 = vmatprep.subr.bf16.mxu0 0
        %2079 = vmatpush1.bf16.msra.mxu0 0
        %2080 = vmatprep.subr.bf16.mxu0 0
        %2081 = vmatpush1.bf16.msra.mxu0 0
        %2082 = vmatprep.subr.bf16.mxu0 0
        %2083 = vmatpush1.bf16.msra.mxu0 0
        %2084 = vmatprep.subr.bf16.mxu0 0
        %2085 = vmatpush1.bf16.msra.mxu0 0
        %2086 = vmatprep.subr.bf16.mxu0 0
        %2087 = vmatpush1.bf16.msra.mxu0 0
        %2088 = vmatprep.subr.bf16.mxu0 0
        %2089 = vmatpush1.bf16.msra.mxu0 0
        %2090 = vmatprep.mubr.bf16.mxu0 0
        %2091 = vmatmul.mubr.bf16.gmra.mrb[0].mxu0 %v491
        %v2092 = vpop.f32.mrb[0].mxu0
        %v2093 = vadd.f32 0.0, %v2092
        %v2094 = vpop.f32.mrb[0].mxu0
        %v2095 = vpop.f32.mrb[0].mxu0
        %v2096 = vadd.f32 0.0, %v2095
        %v2097 = vpop.f32.mrb[0].mxu0
        %2098 = vmatprep.mubr.bf16.mxu0 0
        %2099 = vmatmul.mubr.bf16.gmra.mrb[0].mxu0 %v494
        %v2100 = vpop.f32.mrb[0].mxu0
        %v2101 = vadd.f32 0.0, %v2100
        %v2102 = vpop.f32.mrb[0].mxu0
        %v2103 = vpop.f32.mrb[0].mxu0
        %v2104 = vadd.f32 0.0, %v2103
        %v2105 = vpop.f32.mrb[0].mxu0
        %2106 = vmatprep.mubr.bf16.mxu0 0
        %2107 = vmatmul.mubr.bf16.gmra.mrb[0].mxu0 %v497
        %v2108 = vpop.f32.mrb[0].mxu0
        %v2109 = vadd.f32 0.0, %v2108
        %v2110 = vpop.f32.mrb[0].mxu0
        %v2111 = vpop.f32.mrb[0].mxu0
        %v2112 = vadd.f32 0.0, %v2111
        %v2113 = vpop.f32.mrb[0].mxu0
        %2114 = vmatprep.mubr.bf16.mxu0 0
        %2115 = vmatmul.mubr.bf16.gmra.mrb[0].mxu0 %v500
        %v2116 = vpop.f32.mrb[0].mxu0
        %v2117 = vadd.f32 0.0, %v2116
        %v2118 = vpop.f32.mrb[0].mxu0
        %v2119 = vpop.f32.mrb[0].mxu0
        %v2120 = vadd.f32 0.0, %v2119
        %v2121 = vpop.f32.mrb[0].mxu0
        %2122 = vmatprep.mubr.bf16.mxu0 0
        %2123 = vmatmul.mubr.bf16.gmra.mrb[0].mxu0 %v503
        %v2124 = vpop.f32.mrb[0].mxu0
        %v2125 = vadd.f32 0.0, %v2124
        %v2126 = vpop.f32.mrb[0].mxu0
        %v2127 = vpop.f32.mrb[0].mxu0
        %v2128 = vadd.f32 0.0, %v2127
        %v2129 = vpop.f32.mrb[0].mxu0
        %2130 = vmatprep.mubr.bf16.mxu0 0
        %2131 = vmatmul.mubr.bf16.gmra.mrb[0].mxu0 %v506
        %v2132 = vpop.f32.mrb[0].mxu0
        %v2133 = vadd.f32 0.0, %v2132
        %v2134 = vpop.f32.mrb[0].mxu0
        %v2135 = vpop.f32.mrb[0].mxu0
        %v2136 = vadd.f32 0.0, %v2135
        %v2137 = vpop.f32.mrb[0].mxu0
        %2138 = vmatprep.mubr.bf16.mxu0 0
        %2139 = vmatmul.mubr.bf16.gmra.mrb[0].mxu0 %v1422
        %v2140 = vpop.f32.mrb[0].mxu0
        %v2141 = vadd.f32 0.0, %v2140
        %v2142 = vpop.f32.mrb[0].mxu0
        %v2143 = vpop.f32.mrb[0].mxu0
        %v2144 = vadd.f32 0.0, %v2143
        %v2145 = vpop.f32.mrb[0].mxu0
        %2146 = vmatprep.mubr.bf16.mxu0 0
        %2147 = vmatmul.mubr.bf16.gmra.mrb[0].mxu0 %v2056
        %v2148 = vpop.f32.mrb[0].mxu0
        %v2149 = vadd.f32 0.0, %v2148
        %v2150 = vpop.f32.mrb[0].mxu0
        %v2151 = vpop.f32.mrb[0].mxu0
        %v2152 = vadd.f32 0.0, %v2151
        %v2153 = vpop.f32.mrb[0].mxu0
        %2154 = vdwg.mxu0
        %v2155 = vld [vmem:[#allocation2] sm:$0xff]
        %v2156 = vld [vmem:[#allocation2 + $0x8] sm:$0xff]
        %v2157 = vld [vmem:[#allocation2 + $0x10] sm:$0xff]
        %v2158 = vld [vmem:[#allocation2 + $0x18] sm:$0xff]
        %v2159 = vld [vmem:[#allocation2 + $0x20] sm:$0xff]
        %v2160 = vld [vmem:[#allocation2 + $0x28] sm:$0xff]
        %v2161 = vld [vmem:[#allocation2 + $0x30] sm:$0xff]
        %v2162 = vld [vmem:[#allocation2 + $0x38] sm:$0xff]
        %v2163 = vld [vmem:[#allocation2 + $0x40] sm:$0xff]
        %v2164 = vld [vmem:[#allocation2 + $0x48] sm:$0xff]
        %v2165 = vld [vmem:[#allocation2 + $0x50] sm:$0xff]
        %v2166 = vld [vmem:[#allocation2 + $0x58] sm:$0xff]
        %v2167 = vld [vmem:[#allocation2 + $0x60] sm:$0xff]
        %v2168 = vld [vmem:[#allocation2 + $0x68] sm:$0xff]
        %v2169 = vld [vmem:[#allocation2 + $0x70] sm:$0xff]
        %v2170 = vld [vmem:[#allocation2 + $0x78] sm:$0xff]
        %v2171 = vadd.f32 %v2155, %v2093
        %v2172 = vadd.f32 %v2156, %v2096
        %v2173 = vadd.f32 %v2157, %v2101
        %v2174 = vadd.f32 %v2158, %v2104
        %v2175 = vadd.f32 %v2159, %v2109
        %v2176 = vadd.f32 %v2160, %v2112
        %v2177 = vadd.f32 %v2161, %v2117
        %v2178 = vadd.f32 %v2162, %v2120
        %v2179 = vadd.f32 %v2163, %v2125
        %v2180 = vadd.f32 %v2164, %v2128
        %v2181 = vadd.f32 %v2165, %v2133
        %v2182 = vadd.f32 %v2166, %v2136
        %v2183 = vadd.f32 %v2167, %v2141
        %v2184 = vadd.f32 %v2168, %v2144
        %v2185 = vadd.f32 %v2169, %v2149
        %v2186 = vadd.f32 %v2170, %v2152
        %2187 = vst [vmem:[#allocation2] sm:$0xff] %v2171
        %2188 = vst [vmem:[#allocation2 + $0x8] sm:$0xff] %v2172
        %2189 = vst [vmem:[#allocation2 + $0x10] sm:$0xff] %v2173
        %2190 = vst [vmem:[#allocation2 + $0x18] sm:$0xff] %v2174
        %2191 = vst [vmem:[#allocation2 + $0x20] sm:$0xff] %v2175
        %2192 = vst [vmem:[#allocation2 + $0x28] sm:$0xff] %v2176
        %2193 = vst [vmem:[#allocation2 + $0x30] sm:$0xff] %v2177
        %2194 = vst [vmem:[#allocation2 + $0x38] sm:$0xff] %v2178
        %2195 = vst [vmem:[#allocation2 + $0x40] sm:$0xff] %v2179
        %2196 = vst [vmem:[#allocation2 + $0x48] sm:$0xff] %v2180
        %2197 = vst [vmem:[#allocation2 + $0x50] sm:$0xff] %v2181
        %2198 = vst [vmem:[#allocation2 + $0x58] sm:$0xff] %v2182
        %2199 = vst [vmem:[#allocation2 + $0x60] sm:$0xff] %v2183
        %2200 = vst [vmem:[#allocation2 + $0x68] sm:$0xff] %v2184
        %2201 = vst [vmem:[#allocation2 + $0x70] sm:$0xff] %v2185
        %2202 = vst [vmem:[#allocation2 + $0x78] sm:$0xff] %v2186
        %v2204 = vshrl.u32 %v392, 16
        %v2206 = vrot.slane %v2204, 4
        %v2207 = vshll.u32 %v392, 16
        %v2209 = vrot.slane %v2207, 5
        %v2210 = vor.u32 %v2206, %v2209
        %v2211 = vrot.slane %v2210, 4
        %v2213 = vshll.u32 %v393, 16
        %v2215 = vrot.slane %v2213, 5
        %v2216 = vsel %vm623, %v2211, %v2215
        %v2217 = vshrl.u32 %v393, 16
        %v2219 = vrot.slane %v2217, 4
        %v2220 = vor.u32 %v2219, %v2215
        %v2221 = vrot.slane %v2220, 4
        %v2223 = vshll.u32 %v394, 16
        %v2225 = vrot.slane %v2223, 5
        %v2226 = vsel %vm623, %v2221, %v2225
        %s2227 = scalar_lea.vmem %s356, 336
        %v2228 = vld [vmem:[%s2227] sm:$0xf]
        %v2229 = vld [vmem:[%s2227 + $0x4] sm:$0xf]
        %v2230 = vld [vmem:[%s2227 + $0x8] sm:$0xf]
        %v2231 = vld [vmem:[%s2227 + $0xc] sm:$0xf]
        %v2232 = vld [vmem:[%s2227 + $0x10] sm:$0xf]
        %v2233 = vld [vmem:[%s2227 + $0x14] sm:$0xf]
        %v2234 = vld [vmem:[%s2227 + $0x18] sm:$0xf]
        %v2235 = vld [vmem:[%s2227 + $0x1c] sm:$0xf]
        %v2236 = vld [vmem:[%s2227 + $0x20] sm:$0xf]
        %v2237 = vld [vmem:[%s2227 + $0x24] sm:$0xf]
        %v2238 = vld [vmem:[%s2227 + $0x28] sm:$0xf]
        %v2239 = vld [vmem:[%s2227 + $0x2c] sm:$0xf]
        %v2240 = vunpack.c.l.b16 %v2216
        %v2241 = vunpack.c.l.b16 %v2226
        %v2242 = vpack.c.b16 %v2241, %v2240
        %v2255 = vunpack.c.l.b16 %v2228
        %v2256 = vunpack.c.l.b16 %v2229
        %v2257 = vunpack.c.l.b16 %v2230
        %v2258 = vunpack.c.l.b16 %v2231
        %v2259 = vunpack.c.l.b16 %v2232
        %v2260 = vunpack.c.l.b16 %v2233
        %v2261 = vunpack.c.l.b16 %v2234
        %v2262 = vunpack.c.l.b16 %v2235
        %v2263 = vunpack.c.l.b16 %v2236
        %v2264 = vunpack.c.l.b16 %v2237
        %v2265 = vunpack.c.l.b16 %v2238
        %v2266 = vunpack.c.l.b16 %v2239
        %v2267 = vpack.c.b16 %v2256, %v2255
        %v2268 = vpack.c.b16 %v2258, %v2257
        %v2269 = vpack.c.b16 %v2260, %v2259
        %v2270 = vpack.c.b16 %v2262, %v2261
        %v2271 = vpack.c.b16 %v2264, %v2263
        %v2272 = vpack.c.b16 %v2266, %v2265
        %v2280 = vsel %vm483, %v2242, 0
        %2282 = vmatprep.subr.bf16.mxu0 0
        %2283 = vmatpush1.bf16.msra.mxu0 %v2267
        %2284 = vmatprep.subr.bf16.mxu0 0
        %2285 = vmatpush1.bf16.msra.mxu0 %v2268
        %2286 = vmatprep.subr.bf16.mxu0 0
        %2287 = vmatpush1.bf16.msra.mxu0 %v2269
        %2288 = vmatprep.subr.bf16.mxu0 0
        %2289 = vmatpush1.bf16.msra.mxu0 %v2270
        %2290 = vmatprep.subr.bf16.mxu0 0
        %2291 = vmatpush1.bf16.msra.mxu0 %v2271
        %2292 = vmatprep.subr.bf16.mxu0 0
        %2293 = vmatpush1.bf16.msra.mxu0 %v2272
        %2294 = vmatprep.subr.bf16.mxu0 0
        %2295 = vmatpush1.bf16.msra.mxu0 0
        %2296 = vmatprep.subr.bf16.mxu0 0
        %2297 = vmatpush1.bf16.msra.mxu0 0
        %2298 = vmatprep.subr.bf16.mxu0 0
        %2299 = vmatpush1.bf16.msra.mxu0 0
        %2300 = vmatprep.subr.bf16.mxu0 0
        %2301 = vmatpush1.bf16.msra.mxu0 0
        %2302 = vmatprep.subr.bf16.mxu0 0
        %2303 = vmatpush1.bf16.msra.mxu0 0
        %2304 = vmatprep.subr.bf16.mxu0 0
        %2305 = vmatpush1.bf16.msra.mxu0 0
        %2306 = vmatprep.subr.bf16.mxu0 0
        %2307 = vmatpush1.bf16.msra.mxu0 0
        %2308 = vmatprep.subr.bf16.mxu0 0
        %2309 = vmatpush1.bf16.msra.mxu0 0
        %2310 = vmatprep.subr.bf16.mxu0 0
        %2311 = vmatpush1.bf16.msra.mxu0 0
        %2312 = vmatprep.subr.bf16.mxu0 0
        %2313 = vmatpush1.bf16.msra.mxu0 0
        %2314 = vmatprep.mubr.bf16.mxu0 0
        %2315 = vmatmul.mubr.bf16.gmra.mrb[0].mxu0 %v896
        %v2316 = vpop.f32.mrb[0].mxu0
        %v2317 = vadd.f32 0.0, %v2316
        %v2318 = vpop.f32.mrb[0].mxu0
        %v2319 = vpop.f32.mrb[0].mxu0
        %v2320 = vadd.f32 0.0, %v2319
        %v2321 = vpop.f32.mrb[0].mxu0
        %2322 = vmatprep.mubr.bf16.mxu0 0
        %2323 = vmatmul.mubr.bf16.gmra.mrb[0].mxu0 %v899
        %v2324 = vpop.f32.mrb[0].mxu0
        %v2325 = vadd.f32 0.0, %v2324
        %v2326 = vpop.f32.mrb[0].mxu0
        %v2327 = vpop.f32.mrb[0].mxu0
        %v2328 = vadd.f32 0.0, %v2327
        %v2329 = vpop.f32.mrb[0].mxu0
        %2330 = vmatprep.mubr.bf16.mxu0 0
        %2331 = vmatmul.mubr.bf16.gmra.mrb[0].mxu0 %v902
        %v2332 = vpop.f32.mrb[0].mxu0
        %v2333 = vadd.f32 0.0, %v2332
        %v2334 = vpop.f32.mrb[0].mxu0
        %v2335 = vpop.f32.mrb[0].mxu0
        %v2336 = vadd.f32 0.0, %v2335
        %v2337 = vpop.f32.mrb[0].mxu0
        %2338 = vmatprep.mubr.bf16.mxu0 0
        %2339 = vmatmul.mubr.bf16.gmra.mrb[0].mxu0 %v905
        %v2340 = vpop.f32.mrb[0].mxu0
        %v2341 = vadd.f32 0.0, %v2340
        %v2342 = vpop.f32.mrb[0].mxu0
        %v2343 = vpop.f32.mrb[0].mxu0
        %v2344 = vadd.f32 0.0, %v2343
        %v2345 = vpop.f32.mrb[0].mxu0
        %2346 = vmatprep.mubr.bf16.mxu0 0
        %2347 = vmatmul.mubr.bf16.gmra.mrb[0].mxu0 %v908
        %v2348 = vpop.f32.mrb[0].mxu0
        %v2349 = vadd.f32 0.0, %v2348
        %v2350 = vpop.f32.mrb[0].mxu0
        %v2351 = vpop.f32.mrb[0].mxu0
        %v2352 = vadd.f32 0.0, %v2351
        %v2353 = vpop.f32.mrb[0].mxu0
        %2354 = vmatprep.mubr.bf16.mxu0 0
        %2355 = vmatmul.mubr.bf16.gmra.mrb[0].mxu0 %v911
        %v2356 = vpop.f32.mrb[0].mxu0
        %v2357 = vadd.f32 0.0, %v2356
        %v2358 = vpop.f32.mrb[0].mxu0
        %v2359 = vpop.f32.mrb[0].mxu0
        %v2360 = vadd.f32 0.0, %v2359
        %v2361 = vpop.f32.mrb[0].mxu0
        %2362 = vmatprep.mubr.bf16.mxu0 0
        %2363 = vmatmul.mubr.bf16.gmra.mrb[0].mxu0 %v1646
        %v2364 = vpop.f32.mrb[0].mxu0
        %v2365 = vadd.f32 0.0, %v2364
        %v2366 = vpop.f32.mrb[0].mxu0
        %v2367 = vpop.f32.mrb[0].mxu0
        %v2368 = vadd.f32 0.0, %v2367
        %v2369 = vpop.f32.mrb[0].mxu0
        %2370 = vmatprep.mubr.bf16.mxu0 0
        %2371 = vmatmul.mubr.bf16.gmra.mrb[0].mxu0 %v2280
        %v2372 = vpop.f32.mrb[0].mxu0
        %v2373 = vadd.f32 0.0, %v2372
        %v2374 = vpop.f32.mrb[0].mxu0
        %v2375 = vpop.f32.mrb[0].mxu0
        %v2376 = vadd.f32 0.0, %v2375
        %v2377 = vpop.f32.mrb[0].mxu0
        %2378 = vdwg.mxu0
        %v2379 = vld [vmem:[#allocation2] sm:$0xff]
        %v2380 = vld [vmem:[#allocation2 + $0x8] sm:$0xff]
        %v2381 = vld [vmem:[#allocation2 + $0x10] sm:$0xff]
        %v2382 = vld [vmem:[#allocation2 + $0x18] sm:$0xff]
        %v2383 = vld [vmem:[#allocation2 + $0x20] sm:$0xff]
        %v2384 = vld [vmem:[#allocation2 + $0x28] sm:$0xff]
        %v2385 = vld [vmem:[#allocation2 + $0x30] sm:$0xff]
        %v2386 = vld [vmem:[#allocation2 + $0x38] sm:$0xff]
        %v2387 = vld [vmem:[#allocation2 + $0x40] sm:$0xff]
        %v2388 = vld [vmem:[#allocation2 + $0x48] sm:$0xff]
        %v2389 = vld [vmem:[#allocation2 + $0x50] sm:$0xff]
        %v2390 = vld [vmem:[#allocation2 + $0x58] sm:$0xff]
        %v2391 = vld [vmem:[#allocation2 + $0x60] sm:$0xff]
        %v2392 = vld [vmem:[#allocation2 + $0x68] sm:$0xff]
        %v2393 = vld [vmem:[#allocation2 + $0x70] sm:$0xff]
        %v2394 = vld [vmem:[#allocation2 + $0x78] sm:$0xff]
        %v2395 = vadd.f32 %v2379, %v2317
        %v2396 = vadd.f32 %v2380, %v2320
        %v2397 = vadd.f32 %v2381, %v2325
        %v2398 = vadd.f32 %v2382, %v2328
        %v2399 = vadd.f32 %v2383, %v2333
        %v2400 = vadd.f32 %v2384, %v2336
        %v2401 = vadd.f32 %v2385, %v2341
        %v2402 = vadd.f32 %v2386, %v2344
        %v2403 = vadd.f32 %v2387, %v2349
        %v2404 = vadd.f32 %v2388, %v2352
        %v2405 = vadd.f32 %v2389, %v2357
        %v2406 = vadd.f32 %v2390, %v2360
        %v2407 = vadd.f32 %v2391, %v2365
        %v2408 = vadd.f32 %v2392, %v2368
        %v2409 = vadd.f32 %v2393, %v2373
        %v2410 = vadd.f32 %v2394, %v2376
        %2411 = vst [vmem:[#allocation2] sm:$0xff] %v2395
        %2412 = vst [vmem:[#allocation2 + $0x8] sm:$0xff] %v2396
        %2413 = vst [vmem:[#allocation2 + $0x10] sm:$0xff] %v2397
        %2414 = vst [vmem:[#allocation2 + $0x18] sm:$0xff] %v2398
        %2415 = vst [vmem:[#allocation2 + $0x20] sm:$0xff] %v2399
        %2416 = vst [vmem:[#allocation2 + $0x28] sm:$0xff] %v2400
        %2417 = vst [vmem:[#allocation2 + $0x30] sm:$0xff] %v2401
        %2418 = vst [vmem:[#allocation2 + $0x38] sm:$0xff] %v2402
        %2419 = vst [vmem:[#allocation2 + $0x40] sm:$0xff] %v2403
        %2420 = vst [vmem:[#allocation2 + $0x48] sm:$0xff] %v2404
        %2421 = vst [vmem:[#allocation2 + $0x50] sm:$0xff] %v2405
        %2422 = vst [vmem:[#allocation2 + $0x58] sm:$0xff] %v2406
        %2423 = vst [vmem:[#allocation2 + $0x60] sm:$0xff] %v2407
        %2424 = vst [vmem:[#allocation2 + $0x68] sm:$0xff] %v2408
        %2425 = vst [vmem:[#allocation2 + $0x70] sm:$0xff] %v2409
        %2426 = vst [vmem:[#allocation2 + $0x78] sm:$0xff] %v2410
        %v2428 = vrot.slane %v392, 5
        %v2429 = vrot.slane %v2428, 4
        %v2430 = vrot.slane %v393, 5
        %v2431 = vsel %vm1068, %v2429, %v2430
        %v2432 = vrot.slane %v2430, 4
        %v2433 = vrot.slane %v394, 5
        %v2434 = vsel %vm1068, %v2432, %v2433
        %s2435 = scalar_lea.vmem %s356, 384
        %v2436 = vld [vmem:[%s2435] sm:$0xf]
        %v2437 = vld [vmem:[%s2435 + $0x4] sm:$0xf]
        %v2438 = vld [vmem:[%s2435 + $0x8] sm:$0xf]
        %v2439 = vld [vmem:[%s2435 + $0xc] sm:$0xf]
        %v2440 = vld [vmem:[%s2435 + $0x10] sm:$0xf]
        %v2441 = vld [vmem:[%s2435 + $0x14] sm:$0xf]
        %v2442 = vld [vmem:[%s2435 + $0x18] sm:$0xf]
        %v2443 = vld [vmem:[%s2435 + $0x1c] sm:$0xf]
        %v2444 = vld [vmem:[%s2435 + $0x20] sm:$0xf]
        %v2445 = vld [vmem:[%s2435 + $0x24] sm:$0xf]
        %v2446 = vld [vmem:[%s2435 + $0x28] sm:$0xf]
        %v2447 = vld [vmem:[%s2435 + $0x2c] sm:$0xf]
        %v2448 = vunpack.c.l.b16 %v2431
        %v2449 = vunpack.c.l.b16 %v2434
        %v2450 = vpack.c.b16 %v2449, %v2448
        %v2463 = vunpack.c.l.b16 %v2436
        %v2464 = vunpack.c.l.b16 %v2437
        %v2465 = vunpack.c.l.b16 %v2438
        %v2466 = vunpack.c.l.b16 %v2439
        %v2467 = vunpack.c.l.b16 %v2440
        %v2468 = vunpack.c.l.b16 %v2441
        %v2469 = vunpack.c.l.b16 %v2442
        %v2470 = vunpack.c.l.b16 %v2443
        %v2471 = vunpack.c.l.b16 %v2444
        %v2472 = vunpack.c.l.b16 %v2445
        %v2473 = vunpack.c.l.b16 %v2446
        %v2474 = vunpack.c.l.b16 %v2447
        %v2475 = vpack.c.b16 %v2464, %v2463
        %v2476 = vpack.c.b16 %v2466, %v2465
        %v2477 = vpack.c.b16 %v2468, %v2467
        %v2478 = vpack.c.b16 %v2470, %v2469
        %v2479 = vpack.c.b16 %v2472, %v2471
        %v2480 = vpack.c.b16 %v2474, %v2473
        %v2488 = vsel %vm483, %v2450, 0
        %2490 = vmatprep.subr.bf16.mxu0 0
        %2491 = vmatpush1.bf16.msra.mxu0 %v2475
        %2492 = vmatprep.subr.bf16.mxu0 0
        %2493 = vmatpush1.bf16.msra.mxu0 %v2476
        %2494 = vmatprep.subr.bf16.mxu0 0
        %2495 = vmatpush1.bf16.msra.mxu0 %v2477
        %2496 = vmatprep.subr.bf16.mxu0 0
        %2497 = vmatpush1.bf16.msra.mxu0 %v2478
        %2498 = vmatprep.subr.bf16.mxu0 0
        %2499 = vmatpush1.bf16.msra.mxu0 %v2479
        %2500 = vmatprep.subr.bf16.mxu0 0
        %2501 = vmatpush1.bf16.msra.mxu0 %v2480
        %2502 = vmatprep.subr.bf16.mxu0 0
        %2503 = vmatpush1.bf16.msra.mxu0 0
        %2504 = vmatprep.subr.bf16.mxu0 0
        %2505 = vmatpush1.bf16.msra.mxu0 0
        %2506 = vmatprep.subr.bf16.mxu0 0
        %2507 = vmatpush1.bf16.msra.mxu0 0
        %2508 = vmatprep.subr.bf16.mxu0 0
        %2509 = vmatpush1.bf16.msra.mxu0 0
        %2510 = vmatprep.subr.bf16.mxu0 0
        %2511 = vmatpush1.bf16.msra.mxu0 0
        %2512 = vmatprep.subr.bf16.mxu0 0
        %2513 = vmatpush1.bf16.msra.mxu0 0
        %2514 = vmatprep.subr.bf16.mxu0 0
        %2515 = vmatpush1.bf16.msra.mxu0 0
        %2516 = vmatprep.subr.bf16.mxu0 0
        %2517 = vmatpush1.bf16.msra.mxu0 0
        %2518 = vmatprep.subr.bf16.mxu0 0
        %2519 = vmatpush1.bf16.msra.mxu0 0
        %2520 = vmatprep.subr.bf16.mxu0 0
        %2521 = vmatpush1.bf16.msra.mxu0 0
        %2522 = vmatprep.mubr.bf16.mxu0 0
        %2523 = vmatmul.mubr.bf16.gmra.mrb[0].mxu0 %v1205
        %v2524 = vpop.f32.mrb[0].mxu0
        %v2525 = vadd.f32 0.0, %v2524
        %v2526 = vpop.f32.mrb[0].mxu0
        %v2527 = vpop.f32.mrb[0].mxu0
        %v2528 = vadd.f32 0.0, %v2527
        %v2529 = vpop.f32.mrb[0].mxu0
        %2530 = vmatprep.mubr.bf16.mxu0 0
        %2531 = vmatmul.mubr.bf16.gmra.mrb[0].mxu0 %v1208
        %v2532 = vpop.f32.mrb[0].mxu0
        %v2533 = vadd.f32 0.0, %v2532
        %v2534 = vpop.f32.mrb[0].mxu0
        %v2535 = vpop.f32.mrb[0].mxu0
        %v2536 = vadd.f32 0.0, %v2535
        %v2537 = vpop.f32.mrb[0].mxu0
        %2538 = vmatprep.mubr.bf16.mxu0 0
        %2539 = vmatmul.mubr.bf16.gmra.mrb[0].mxu0 %v1211
        %v2540 = vpop.f32.mrb[0].mxu0
        %v2541 = vadd.f32 0.0, %v2540
        %v2542 = vpop.f32.mrb[0].mxu0
        %v2543 = vpop.f32.mrb[0].mxu0
        %v2544 = vadd.f32 0.0, %v2543
        %v2545 = vpop.f32.mrb[0].mxu0
        %2546 = vmatprep.mubr.bf16.mxu0 0
        %2547 = vmatmul.mubr.bf16.gmra.mrb[0].mxu0 %v1214
        %v2548 = vpop.f32.mrb[0].mxu0
        %v2549 = vadd.f32 0.0, %v2548
        %v2550 = vpop.f32.mrb[0].mxu0
        %v2551 = vpop.f32.mrb[0].mxu0
        %v2552 = vadd.f32 0.0, %v2551
        %v2553 = vpop.f32.mrb[0].mxu0
        %2554 = vmatprep.mubr.bf16.mxu0 0
        %2555 = vmatmul.mubr.bf16.gmra.mrb[0].mxu0 %v1217
        %v2556 = vpop.f32.mrb[0].mxu0
        %v2557 = vadd.f32 0.0, %v2556
        %v2558 = vpop.f32.mrb[0].mxu0
        %v2559 = vpop.f32.mrb[0].mxu0
        %v2560 = vadd.f32 0.0, %v2559
        %v2561 = vpop.f32.mrb[0].mxu0
        %2562 = vmatprep.mubr.bf16.mxu0 0
        %2563 = vmatmul.mubr.bf16.gmra.mrb[0].mxu0 %v1220
        %v2564 = vpop.f32.mrb[0].mxu0
        %v2565 = vadd.f32 0.0, %v2564
        %v2566 = vpop.f32.mrb[0].mxu0
        %v2567 = vpop.f32.mrb[0].mxu0
        %v2568 = vadd.f32 0.0, %v2567
        %v2569 = vpop.f32.mrb[0].mxu0
        %2570 = vmatprep.mubr.bf16.mxu0 0
        %2571 = vmatmul.mubr.bf16.gmra.mrb[0].mxu0 %v1854
        %v2572 = vpop.f32.mrb[0].mxu0
        %v2573 = vadd.f32 0.0, %v2572
        %v2574 = vpop.f32.mrb[0].mxu0
        %v2575 = vpop.f32.mrb[0].mxu0
        %v2576 = vadd.f32 0.0, %v2575
        %v2577 = vpop.f32.mrb[0].mxu0
        %2578 = vmatprep.mubr.bf16.mxu0 0
        %2579 = vmatmul.mubr.bf16.gmra.mrb[0].mxu0 %v2488
        %v2580 = vpop.f32.mrb[0].mxu0
        %v2581 = vadd.f32 0.0, %v2580
        %v2582 = vpop.f32.mrb[0].mxu0
        %v2583 = vpop.f32.mrb[0].mxu0
        %v2584 = vadd.f32 0.0, %v2583
        %v2585 = vpop.f32.mrb[0].mxu0
        %2586 = vdwg.mxu0
        %v2587 = vld [vmem:[#allocation2] sm:$0xff]
        %v2588 = vld [vmem:[#allocation2 + $0x8] sm:$0xff]
        %v2589 = vld [vmem:[#allocation2 + $0x10] sm:$0xff]
        %v2590 = vld [vmem:[#allocation2 + $0x18] sm:$0xff]
        %v2591 = vld [vmem:[#allocation2 + $0x20] sm:$0xff]
        %v2592 = vld [vmem:[#allocation2 + $0x28] sm:$0xff]
        %v2593 = vld [vmem:[#allocation2 + $0x30] sm:$0xff]
        %v2594 = vld [vmem:[#allocation2 + $0x38] sm:$0xff]
        %v2595 = vld [vmem:[#allocation2 + $0x40] sm:$0xff]
        %v2596 = vld [vmem:[#allocation2 + $0x48] sm:$0xff]
        %v2597 = vld [vmem:[#allocation2 + $0x50] sm:$0xff]
        %v2598 = vld [vmem:[#allocation2 + $0x58] sm:$0xff]
        %v2599 = vld [vmem:[#allocation2 + $0x60] sm:$0xff]
        %v2600 = vld [vmem:[#allocation2 + $0x68] sm:$0xff]
        %v2601 = vld [vmem:[#allocation2 + $0x70] sm:$0xff]
        %v2602 = vld [vmem:[#allocation2 + $0x78] sm:$0xff]
        %v2603 = vadd.f32 %v2587, %v2525
        %v2604 = vadd.f32 %v2588, %v2528
        %v2605 = vadd.f32 %v2589, %v2533
        %v2606 = vadd.f32 %v2590, %v2536
        %v2607 = vadd.f32 %v2591, %v2541
        %v2608 = vadd.f32 %v2592, %v2544
        %v2609 = vadd.f32 %v2593, %v2549
        %v2610 = vadd.f32 %v2594, %v2552
        %v2611 = vadd.f32 %v2595, %v2557
        %v2612 = vadd.f32 %v2596, %v2560
        %v2613 = vadd.f32 %v2597, %v2565
        %v2614 = vadd.f32 %v2598, %v2568
        %v2615 = vadd.f32 %v2599, %v2573
        %v2616 = vadd.f32 %v2600, %v2576
        %v2617 = vadd.f32 %v2601, %v2581
        %v2618 = vadd.f32 %v2602, %v2584
        %2619 = vst [vmem:[#allocation2] sm:$0xff] %v2603
        %2620 = vst [vmem:[#allocation2 + $0x8] sm:$0xff] %v2604
        %2621 = vst [vmem:[#allocation2 + $0x10] sm:$0xff] %v2605
        %2622 = vst [vmem:[#allocation2 + $0x18] sm:$0xff] %v2606
        %2623 = vst [vmem:[#allocation2 + $0x20] sm:$0xff] %v2607
        %2624 = vst [vmem:[#allocation2 + $0x28] sm:$0xff] %v2608
        %2625 = vst [vmem:[#allocation2 + $0x30] sm:$0xff] %v2609
        %2626 = vst [vmem:[#allocation2 + $0x38] sm:$0xff] %v2610
        %2627 = vst [vmem:[#allocation2 + $0x40] sm:$0xff] %v2611
        %2628 = vst [vmem:[#allocation2 + $0x48] sm:$0xff] %v2612
        %2629 = vst [vmem:[#allocation2 + $0x50] sm:$0xff] %v2613
        %2630 = vst [vmem:[#allocation2 + $0x58] sm:$0xff] %v2614
        %2631 = vst [vmem:[#allocation2 + $0x60] sm:$0xff] %v2615
        %2632 = vst [vmem:[#allocation2 + $0x68] sm:$0xff] %v2616
        %2633 = vst [vmem:[#allocation2 + $0x70] sm:$0xff] %v2617
        %2634 = vst [vmem:[#allocation2 + $0x78] sm:$0xff] %v2618
        %v2635 = vld [vmem:[#allocation2] sm:$0xff]
        %v2636 = vld [vmem:[#allocation2 + $0x8] sm:$0xff]
        %v2637 = vld [vmem:[#allocation2 + $0x10] sm:$0xff]
        %v2638 = vld [vmem:[#allocation2 + $0x18] sm:$0xff]
        %v2639 = vld [vmem:[#allocation2 + $0x20] sm:$0xff]
        %v2640 = vld [vmem:[#allocation2 + $0x28] sm:$0xff]
        %v2641 = vld [vmem:[#allocation2 + $0x30] sm:$0xff]
        %v2642 = vld [vmem:[#allocation2 + $0x38] sm:$0xff]
        %v2643 = vld [vmem:[#allocation2 + $0x40] sm:$0xff]
        %v2644 = vld [vmem:[#allocation2 + $0x48] sm:$0xff]
        %v2645 = vld [vmem:[#allocation2 + $0x50] sm:$0xff]
        %v2646 = vld [vmem:[#allocation2 + $0x58] sm:$0xff]
        %v2647 = vld [vmem:[#allocation2 + $0x60] sm:$0xff]
        %v2648 = vld [vmem:[#allocation2 + $0x68] sm:$0xff]
        %v2649 = vld [vmem:[#allocation2 + $0x70] sm:$0xff]
        %v2650 = vld [vmem:[#allocation2 + $0x78] sm:$0xff]
        %v2651 = vld [vmem:[%s359] sm:$0x1]
        %v2653 = vlaneseq
        %v2654 = vshrl.u32 %v2653, 7
        %v2655 = vsub.s32 0, %v2654
        %v2656 = vrot.slane %v2651, %v2655
        %v2658 = vmul.f32 %v2635, %v2656
        %v2659 = vmul.f32 %v2636, %v2656
        %v2660 = vmul.f32 %v2637, %v2656
        %v2661 = vmul.f32 %v2638, %v2656
        %v2662 = vmul.f32 %v2639, %v2656
        %v2663 = vmul.f32 %v2640, %v2656
        %v2664 = vmul.f32 %v2641, %v2656
        %v2665 = vmul.f32 %v2642, %v2656
        %v2666 = vmul.f32 %v2643, %v2656
        %v2667 = vmul.f32 %v2644, %v2656
        %v2668 = vmul.f32 %v2645, %v2656
        %v2669 = vmul.f32 %v2646, %v2656
        %v2670 = vmul.f32 %v2647, %v2656
        %v2671 = vmul.f32 %v2648, %v2656
        %v2672 = vmul.f32 %v2649, %v2656
        %v2673 = vmul.f32 %v2650, %v2656
        %v2674 = vld [vmem:[%s362] sm:$0x1]
        %v2676 = vlaneseq
        %v2677 = vshrl.u32 %v2676, 7
        %v2678 = vsub.s32 0, %v2677
        %v2679 = vrot.slane %v2674, %v2678
        %v2681 = vadd.f32 %v2658, %v2679
        %v2682 = vadd.f32 %v2659, %v2679
        %v2683 = vadd.f32 %v2660, %v2679
        %v2684 = vadd.f32 %v2661, %v2679
        %v2685 = vadd.f32 %v2662, %v2679
        %v2686 = vadd.f32 %v2663, %v2679
        %v2687 = vadd.f32 %v2664, %v2679
        %v2688 = vadd.f32 %v2665, %v2679
        %v2689 = vadd.f32 %v2666, %v2679
        %v2690 = vadd.f32 %v2667, %v2679
        %v2691 = vadd.f32 %v2668, %v2679
        %v2692 = vadd.f32 %v2669, %v2679
        %v2693 = vadd.f32 %v2670, %v2679
        %v2694 = vadd.f32 %v2671, %v2679
        %v2695 = vadd.f32 %v2672, %v2679
        %v2696 = vadd.f32 %v2673, %v2679
        %v2697 = vmax.f32 %v2681, 0.0
        %v2698 = vmax.f32 %v2682, 0.0
        %v2699 = vmax.f32 %v2683, 0.0
        %v2700 = vmax.f32 %v2684, 0.0
        %v2701 = vmax.f32 %v2685, 0.0
        %v2702 = vmax.f32 %v2686, 0.0
        %v2703 = vmax.f32 %v2687, 0.0
        %v2704 = vmax.f32 %v2688, 0.0
        %v2705 = vmax.f32 %v2689, 0.0
        %v2706 = vmax.f32 %v2690, 0.0
        %v2707 = vmax.f32 %v2691, 0.0
        %v2708 = vmax.f32 %v2692, 0.0
        %v2709 = vmax.f32 %v2693, 0.0
        %v2710 = vmax.f32 %v2694, 0.0
        %v2711 = vmax.f32 %v2695, 0.0
        %v2712 = vmax.f32 %v2696, 0.0
        %v2713 = vpack.c.bf16 %v2698, %v2697
        %v2714 = vpack.c.bf16 %v2700, %v2699
        %v2715 = vpack.c.bf16 %v2702, %v2701
        %v2716 = vpack.c.bf16 %v2704, %v2703
        %v2717 = vpack.c.bf16 %v2706, %v2705
        %v2718 = vpack.c.bf16 %v2708, %v2707
        %v2719 = vpack.c.bf16 %v2710, %v2709
        %v2720 = vpack.c.bf16 %v2712, %v2711
        %v2729 = vunpack.c.l.b16 %v2713
        %v2730 = vunpack.c.h.b16 %v2713
        %v2731 = vunpack.c.l.b16 %v2714
        %v2732 = vunpack.c.h.b16 %v2714
        %v2733 = vunpack.c.l.b16 %v2715
        %v2734 = vunpack.c.h.b16 %v2715
        %v2735 = vunpack.c.l.b16 %v2716
        %v2736 = vunpack.c.h.b16 %v2716
        %v2737 = vunpack.c.l.b16 %v2717
        %v2738 = vunpack.c.h.b16 %v2717
        %v2739 = vunpack.c.l.b16 %v2718
        %v2740 = vunpack.c.h.b16 %v2718
        %v2741 = vunpack.c.l.b16 %v2719
        %v2742 = vunpack.c.h.b16 %v2719
        %v2743 = vunpack.c.l.b16 %v2720
        %v2744 = vunpack.c.h.b16 %v2720
        %v2745 = vpack.c.b16 %v2729, %v2729
        %v2746 = vpack.c.b16 %v2730, %v2730
        %v2747 = vpack.c.b16 %v2731, %v2731
        %v2748 = vpack.c.b16 %v2732, %v2732
        %v2749 = vpack.c.b16 %v2733, %v2733
        %v2750 = vpack.c.b16 %v2734, %v2734
        %v2751 = vpack.c.b16 %v2735, %v2735
        %v2752 = vpack.c.b16 %v2736, %v2736
        %v2753 = vpack.c.b16 %v2737, %v2737
        %v2754 = vpack.c.b16 %v2738, %v2738
        %v2755 = vpack.c.b16 %v2739, %v2739
        %v2756 = vpack.c.b16 %v2740, %v2740
        %v2757 = vpack.c.b16 %v2741, %v2741
        %v2758 = vpack.c.b16 %v2742, %v2742
        %v2759 = vpack.c.b16 %v2743, %v2743
        %v2760 = vpack.c.b16 %v2744, %v2744
        %2777 = vst [vmem:[%s326] sm:$0xf] %v2745
        %2778 = vst [vmem:[%s326 + $0x4] sm:$0xf] %v2746
        %2779 = vst [vmem:[%s326 + $0x8] sm:$0xf] %v2747
        %2780 = vst [vmem:[%s326 + $0xc] sm:$0xf] %v2748
        %2781 = vst [vmem:[%s326 + $0x10] sm:$0xf] %v2749
        %2782 = vst [vmem:[%s326 + $0x14] sm:$0xf] %v2750
        %2783 = vst [vmem:[%s326 + $0x18] sm:$0xf] %v2751
        %2784 = vst [vmem:[%s326 + $0x1c] sm:$0xf] %v2752
        %2785 = vst [vmem:[%s326 + $0x20] sm:$0xf] %v2753
        %2786 = vst [vmem:[%s326 + $0x24] sm:$0xf] %v2754
        %2787 = vst [vmem:[%s326 + $0x28] sm:$0xf] %v2755
        %2788 = vst [vmem:[%s326 + $0x2c] sm:$0xf] %v2756
        %2789 = vst [vmem:[%s326 + $0x30] sm:$0xf] %v2757
        %2790 = vst [vmem:[%s326 + $0x34] sm:$0xf] %v2758
        %2791 = vst [vmem:[%s326 + $0x38] sm:$0xf] %v2759
        %2792 = vst [vmem:[%s326 + $0x3c] sm:$0xf] %v2760
        %s2793 = sand.u32 %s188, 1
        %s2794 = scalar_lea.sflag [#allocation4], %s2793
        %s2795 = sand.u32 %s188, 1
        %s2796 = smul.addr %s2795, 64
        %s2797 = scalar_lea.vmem [#allocation3], %s2796
        // Predicated region
        $region41: #{tpu_custom_call.1} parent=39 // pred_check
          %p2798 = pneg %p198
        $region42: #{tpu_custom_call.1} parent=39 // pred_check_branch
          %2800 = sbr.rel (%p2798) target = $region44
        $region43: #{tpu_custom_call.1} parent=39 // pred_region
          %s2801 = smul.u32 8, %s26
          %s2803 = ssub.s32 1024, 1024
          %2804 = vsyncadd %s2794, %s2803
          %s2805 = smul.addr %s2801, 2
          %s2806 = sadd.s32 %s25, %s2805
          %s2807 = smul.addr %s24, 32
          %s2808 = sadd.s32 %s2806, %s2807
          %s2809 = smul.addr %s2808, 64
          %s2810 = scalar_lea.hbm %s5, %s2809
          %s2811 = sshll.u32 %s2797, 4
          %s2812 = int_to_ptr.vmem [resolvable:$true] %s2811
          %2817 = dma.vmem_to_hbm [thread:$0]  %s2812, 1024, %s2810, %s2794, 64, 64, 4
        $region44: #{tpu_custom_call.1} parent=39 // pred_fallthru
          _
      $region40: #{tpu_custom_call.1} parent=5 // pred_fallthru
        _
      %p2818 = scmp.le.s32.totalorder 2, %s14
      // Predicated region
      $region45: #{tpu_custom_call.1} parent=5 // pred_check
        %p2819 = pneg %p2818
      $region46: #{tpu_custom_call.1} parent=5 // pred_check_branch
        %2821 = sbr.rel (%p2819) target = $region48
      $region47: #{tpu_custom_call.1} parent=5 // pred_region
        %s2822 = ssub.s32 %s14, 2
        // Predicated region
        $region49: #{tpu_custom_call.1} parent=47 // pred_check
          %p2823 = pneg %p204
        $region50: #{tpu_custom_call.1} parent=47 // pred_check_branch
          %2825 = sbr.rel (%p2823) target = $region52
        $region51: #{tpu_custom_call.1} parent=47 // pred_region
          %s2826 = sand.u32 %s189, 1
          %s2827 = scalar_lea.sflag [#allocation4], %s2826
          %s2828 = sand.u32 %s189, 1
          %s2829 = smul.addr %s2828, 64
          %s2830 = scalar_lea.vmem [#allocation3], %s2829
          %2831 = dma.done %s2827, 1024
        $region52: #{tpu_custom_call.1} parent=47 // pred_fallthru
          _
      $region48: #{tpu_custom_call.1} parent=5 // pred_fallthru
        _
    $region6: #{tpu_custom_call.1} parent=1 // loop_footer
      %s18 = sadd.s32 1, %s14
    $region7: #{tpu_custom_call.1} parent=1 // loop_footer_branch
      %13 = sbr.rel target = $region3
    $region8: #{tpu_custom_call.1} parent=1 // loop_exit
      _
    %2832 = vsyncpa [#allocation4], 1
    %s2833 = scalar_lea.sflag [#allocation4], 1
    %2834 = vsyncpa %s2833, 1

</llo_original>
